<compile_context>
chip_gen: v7x
topology: tpu7x:2x2x1
jax: 0.10.0
libtpu: 0.0.40
codegen_flags: <defaults>
</compile_context>

<pallas_src>
import jax
import jax.numpy as jnp
import numpy as np
from jax.experimental import pallas as pl
from jax.experimental.pallas import tpu as pltpu

NUM_CAPSULES = 8
OUT_CHANNELS = 32
KERNEL = 9
STRIDE = 2


# ----------------------------- Pallas kernels ------------------------------

def _conv_matmul_kernel(w_ref, p_ref, b_ref, o_ref, acc_ref):
    # w: (256, tk) bf16, p: (1, tk, 36) bf16, b: (256, 1) f32
    # o: (1, 256, 36) f32, acc scratch: (256, 36) f32
    k = pl.program_id(1)

    @pl.when(k == 0)
    def _init():
        acc_ref[...] = jnp.zeros_like(acc_ref)

    acc_ref[...] += jnp.dot(w_ref[...], p_ref[0],
                            preferred_element_type=jnp.float32)

    @pl.when(k == pl.num_programs(1) - 1)
    def _finalize():
        o_ref[0] = acc_ref[...] + b_ref[...]


def _squash_kernel(y_ref, g_ref, o_ref):
    # y: (tr, 128) f32 — each 128-lane row holds 16 complete groups of 8
    # g: (128, 128) f32 block-diagonal ones (group membership matrix)
    y = y_ref[...]
    # Per-group sum of squares, broadcast back to every lane of the group,
    # via one tiny MXU matmul (no reshapes, no masked stores).
    sq = jnp.dot(y * y, g_ref[...], preferred_element_type=jnp.float32)
    # squash factor: sq / ((1+sq)*sqrt(sq)) == sqrt(sq)/(1+sq); EUP ops + eps.
    factor = sq * jax.lax.rsqrt(sq + 1e-12) * pl.reciprocal(1.0 + sq, approx=True)
    o_ref[...] = y * factor


# ------------------------------- glue (JAX) --------------------------------

def _round_up(x, m):
    return (x + m - 1) // m * m


def _pick_tile(total, preferred):
    for cand in preferred:
        if cand <= total and total % cand == 0:
            return cand
    return total


def _im2col_t(x, k, s):
    """x: (B, C, H, W) -> patches^T: (B, C*k*k, OH*OW).

    K ordered (c, kh, kw) to match the flattened PyTorch Conv2d weight layout
    (O, C, kh, kw).  No 5-D transpose pass (only contiguous merges)."""
    B, C, H, W = x.shape
    OH = (H - k) // s + 1
    OW = (W - k) // s + 1
    cols = []
    for i in range(k):
        for j in range(k):
            cols.append(x[:, :, i:i + s * OH:s, j:j + s * OW:s])  # (B, C, OH, OW)
    p = jnp.stack(cols, axis=2)                    # (B, C, k*k, OH, OW)
    return p.reshape(B, C * k * k, OH * OW), OH, OW


def primary_caps_forward(x, weights, biases):
    """weights: (num_caps, out_ch, C, k, k), biases: (num_caps, out_ch)."""
    B, C, H, W = x.shape
    N = NUM_CAPSULES * OUT_CHANNELS                     # 256
    K = C * KERNEL * KERNEL

    # bf16 im2col: halves HBM bytes of the dominant patch operand.
    patches, OH, OW = _im2col_t(x.astype(jnp.bfloat16), KERNEL, STRIDE)
    P = OH * OW                                         # 36

    # Pad K to a multiple of 128 with zeros (patches AND weights) so the K
    # axis can be tiled with lane-aligned weight blocks.
    Kp = _round_up(K, 128)
    patches = jnp.pad(patches, ((0, 0), (0, Kp - K), (0, 0)))
    w = jnp.pad(weights.reshape(N, K).astype(jnp.bfloat16), ((0, 0), (0, Kp - K)))
    b = biases.reshape(N, 1).astype(jnp.float32)

    tk = _pick_tile(Kp, (2048, 1536, 1280, 1024, 896, 768, 640, 512, 384, 256, 128))
    nk = Kp // tk

    # --- kernel 1: all 8 capsule convs as one tiled bf16 matmul on the MXU ---
    # out[b, cap*32+ch, oh*6+ow]  (flattened == torch.stack(...,1).view layout)
    conv_out = pl.pallas_call(
        _conv_matmul_kernel,
        out_shape=jax.ShapeDtypeStruct((B, N, P), jnp.float32),
        grid=(B, nk),
        in_specs=[
            pl.BlockSpec((N, tk), lambda bi, ki: (0, ki)),           # weights
            pl.BlockSpec((1, tk, P), lambda bi, ki: (bi, ki, 0)),    # patches^T
            pl.BlockSpec((N, 1), lambda bi, ki: (0, 0)),             # bias
        ],
        out_specs=pl.BlockSpec((1, N, P), lambda bi, ki: (bi, 0, 0)),
        scratch_shapes=[pltpu.VMEM((N, P), jnp.float32)],
        compiler_params=pltpu.CompilerParams(
            dimension_semantics=("parallel", "arbitrary"),
            vmem_limit_bytes=32 * 1024 * 1024),
    )(w, patches, b)

    # (B, 256, 36) row-major flat == torch .view(B, 1152, 8) flat.  View it as
    # (B*72, 128): lane-dense, each row holds exactly 16 groups of 8.
    total = B * N * P
    R = total // 128
    y = conv_out.reshape(R, 128)

    lane = jnp.arange(128)
    gmat = (lane[:, None] // NUM_CAPSULES
            == lane[None, :] // NUM_CAPSULES).astype(jnp.float32)    # (128,128)

    tr = _pick_tile(R, (512, 256, 144, 128, 72, 64, 48, 40, 32, 24, 16, 8))

    # --- kernel 2: lane-dense squash ---
    squashed = pl.pallas_call(
        _squash_kernel,
        out_shape=jax.ShapeDtypeStruct((R, 128), jnp.float32),
        grid=(R // tr,),
        in_specs=[
            pl.BlockSpec((tr, 128), lambda i: (i, 0)),
            pl.BlockSpec((128, 128), lambda i: (0, 0)),
        ],
        out_specs=pl.BlockSpec((tr, 128), lambda i: (i, 0)),
        compiler_params=pltpu.CompilerParams(
            dimension_semantics=("parallel",),
            vmem_limit_bytes=32 * 1024 * 1024),
    )(y, gmat)

    return squashed.reshape(B, OUT_CHANNELS * OH * OW, NUM_CAPSULES)


# --------------------------- pure-JAX reference -----------------------------

def reference(x, weights, biases):
    outs = []
    for c in range(NUM_CAPSULES):
        o = jax.lax.conv_general_dilated(
            x, weights[c], window_strides=(STRIDE, STRIDE), padding="VALID",
            dimension_numbers=("NCHW", "OIHW", "NCHW"),
            precision=jax.lax.Precision.HIGHEST)
        outs.append(o + biases[c][None, :, None, None])
    u = jnp.stack(outs, axis=1)                           # (B, 8, 32, 6, 6)
    u = u.reshape(x.shape[0], OUT_CHANNELS * 6 * 6, -1)   # (B, 1152, 8)
    sq = jnp.sum(u * u, axis=-1, keepdims=True)
    return sq * u / ((1.0 + sq) * jnp.sqrt(sq))


# ---------------------------------- main ------------------------------------

if __name__ == "__main__":
    key = jax.random.PRNGKey(0)
    k1, k2, k3 = jax.random.split(key, 3)

    # 20x20 spatial -> 6x6 conv output (the module's .view hardcodes 32*6*6).
    # in_channels shrunk from 256 to 32 to keep the example small.
    B, C, H, W = 2, 32, 20, 20
    x = jax.random.normal(k1, (B, C, H, W), dtype=jnp.float32)
    weights = 0.05 * jax.random.normal(
        k2, (NUM_CAPSULES, OUT_CHANNELS, C, KERNEL, KERNEL), dtype=jnp.float32)
    biases = 0.01 * jax.random.normal(
        k3, (NUM_CAPSULES, OUT_CHANNELS), dtype=jnp.float32)

    fwd = jax.jit(primary_caps_forward)
    out = jax.block_until_ready(fwd(x, weights, biases))

    ref = jax.block_until_ready(reference(x, weights, biases))
    np.testing.assert_allclose(np.asarray(out), np.asarray(ref),
                               rtol=5e-2, atol=1e-2)
    assert out.shape == (B, OUT_CHANNELS * 6 * 6, NUM_CAPSULES)
    print("KERNEL_OK")
</pallas_src>

<mosaic_0001>
module attributes {stable_mosaic.version = 11 : i64} {
  func.func @_conv_matmul_kernel(%arg0: i32, %arg1: i32, %arg2: memref<256x896xbf16, #tpu.memory_space<vmem>>, %arg3: memref<1x896x36xbf16, #tpu.memory_space<vmem>>, %arg4: memref<256x1xf32, #tpu.memory_space<vmem>>, %arg5: memref<1x256x36xf32, #tpu.memory_space<vmem>>, %arg6: memref<256x36xf32, #tpu.memory_space<vmem>>) attributes {dimension_semantics = [#tpu.dimension_semantics<parallel>, #tpu.dimension_semantics<arbitrary>], iteration_bounds = array<i64: 2, 3>, scalar_prefetch = 0 : i64, scratch_operands = 1 : i64, tpu.core_type = #tpu.core_type<tc>, window_params = [{transform_indices = @transform_0, window_bounds = array<i64: 256, 896>}, {transform_indices = @transform_1, window_bounds = array<i64: 1, 896, 36>}, {pipeline_mode = #tpu.pipeline_mode<synchronous>, transform_indices = @transform_2, window_bounds = array<i64: 256, 1>}, {transform_indices = @transform_3, window_bounds = array<i64: 1, 256, 36>}]} {
    %c0_i32 = arith.constant 0 : i32
    %0 = arith.cmpi eq, %arg1, %c0_i32 : i32
    %1 = arith.extui %0 : i1 to i32
    %c0_i32_0 = arith.constant 0 : i32
    %2 = arith.cmpi ne, %1, %c0_i32_0 : i32
    scf.if %2 {
      %cst_10 = arith.constant 0.000000e+00 : f32
      %13 = vector.broadcast %cst_10 : f32 to vector<256x36xf32>
      %c0_11 = arith.constant 0 : index
      %c0_12 = arith.constant 0 : index
      %14 = vector.load %arg6[%c0_11, %c0_12] : memref<256x36xf32, #tpu.memory_space<vmem>>, vector<256x36xf32>
      tpu.vector_store %arg6[%c0_11, %c0_12], %13 {strides = array<i32>} : memref<256x36xf32, #tpu.memory_space<vmem>>, vector<256x36xf32>,
    } else {
    }
    %c0 = arith.constant 0 : index
    %c0_1 = arith.constant 0 : index
    %3 = vector.load %arg6[%c0, %c0_1] : memref<256x36xf32, #tpu.memory_space<vmem>>, vector<256x36xf32>
    %c0_2 = arith.constant 0 : index
    %c0_3 = arith.constant 0 : index
    %4 = vector.load %arg2[%c0_2, %c0_3] : memref<256x896xbf16, #tpu.memory_space<vmem>>, vector<256x896xbf16>
    %c0_4 = arith.constant 0 : index
    %c0_5 = arith.constant 0 : index
    %c0_6 = arith.constant 0 : index
    %5 = vector.load %arg3[%c0_4, %c0_5, %c0_6] : memref<1x896x36xbf16, #tpu.memory_space<vmem>>, vector<1x896x36xbf16>
    %6 = vector.shape_cast %5 : vector<1x896x36xbf16> to vector<896x36xbf16>
    %cst = arith.constant dense<0.000000e+00> : vector<256x36xf32>
    %7 = tpu.matmul %4, %6, %cst {dimension_numbers = #tpu.dot_dimension_numbers<[1], [0], [0], [1], [0, 0, 1, 1], [], []>} : vector<256x896xbf16>, vector<896x36xbf16>, vector<256x36xf32> -> vector<256x36xf32>
    %8 = arith.addf %3, %7 : vector<256x36xf32>
    %c0_7 = arith.constant 0 : index
    %c0_8 = arith.constant 0 : index
    %9 = vector.load %arg6[%c0_7, %c0_8] : memref<256x36xf32, #tpu.memory_space<vmem>>, vector<256x36xf32>
    tpu.vector_store %arg6[%c0_7, %c0_8], %8 {strides = array<i32>} : memref<256x36xf32, #tpu.memory_space<vmem>>, vector<256x36xf32>,
    %c2_i32 = arith.constant 2 : i32
    %10 = arith.cmpi eq, %arg1, %c2_i32 : i32
    %11 = arith.extui %10 : i1 to i32
    %c0_i32_9 = arith.constant 0 : i32
    %12 = arith.cmpi ne, %11, %c0_i32_9 : i32
    scf.if %12 {
      %c0_10 = arith.constant 0 : index
      %c0_11 = arith.constant 0 : index
      %13 = vector.load %arg6[%c0_10, %c0_11] : memref<256x36xf32, #tpu.memory_space<vmem>>, vector<256x36xf32>
      %c0_12 = arith.constant 0 : index
      %c0_13 = arith.constant 0 : index
      %14 = vector.load %arg4[%c0_12, %c0_13] : memref<256x1xf32, #tpu.memory_space<vmem>>, vector<256x1xf32>
      %15 = vector.broadcast %14 : vector<256x1xf32> to vector<256x36xf32>
      %16 = arith.addf %13, %15 : vector<256x36xf32>
      %c0_14 = arith.constant 0 : index
      %c0_15 = arith.constant 0 : index
      %c0_16 = arith.constant 0 : index
      %17 = vector.load %arg5[%c0_14, %c0_15, %c0_16] : memref<1x256x36xf32, #tpu.memory_space<vmem>>, vector<1x256x36xf32>
      %18 = vector.shape_cast %17 : vector<1x256x36xf32> to vector<256x36xf32>
      %19 = vector.shape_cast %16 : vector<256x36xf32> to vector<1x256x36xf32>
      tpu.vector_store %arg5[%c0_14, %c0_15, %c0_16], %19 {strides = array<i32>} : memref<1x256x36xf32, #tpu.memory_space<vmem>>, vector<1x256x36xf32>,
    } else {
    }
    return
  }
  func.func @transform_0(%arg0: i32, %arg1: i32) -> (i32, i32) {
    %c0_i32 = arith.constant 0 : i32
    %c0_i32_0 = arith.constant 0 : i32
    return %c0_i32, %arg1 : i32, i32
  }
  func.func @transform_1(%arg0: i32, %arg1: i32) -> (i32, i32, i32) {
    %c0_i32 = arith.constant 0 : i32
    %c0_i32_0 = arith.constant 0 : i32
    return %arg0, %arg1, %c0_i32 : i32, i32, i32
  }
  func.func @transform_2(%arg0: i32, %arg1: i32) -> (i32, i32) {
    %c0_i32 = arith.constant 0 : i32
    %c0_i32_0 = arith.constant 0 : i32
    %c0_i32_1 = arith.constant 0 : i32
    return %c0_i32, %c0_i32_0 : i32, i32
  }
  func.func @transform_3(%arg0: i32, %arg1: i32) -> (i32, i32, i32) {
    %c0_i32 = arith.constant 0 : i32
    %c0_i32_0 = arith.constant 0 : i32
    %c0_i32_1 = arith.constant 0 : i32
    return %arg0, %c0_i32, %c0_i32_0 : i32, i32, i32
  }
}

module attributes {stable_mosaic.version = 11 : i64} {
  func.func @_squash_kernel(%arg0: i32, %arg1: memref<144x128xf32, #tpu.memory_space<vmem>>, %arg2: memref<128x128xf32, #tpu.memory_space<vmem>>, %arg3: memref<144x128xf32, #tpu.memory_space<vmem>>) attributes {dimension_semantics = [#tpu.dimension_semantics<parallel>], iteration_bounds = array<i64: 1>, scalar_prefetch = 0 : i64, scratch_operands = 0 : i64, tpu.core_type = #tpu.core_type<tc>, window_params = [{transform_indices = @transform_0, window_bounds = array<i64: 144, 128>}, {pipeline_mode = #tpu.pipeline_mode<synchronous>, transform_indices = @transform_1, window_bounds = array<i64: 128, 128>}, {transform_indices = @transform_2, window_bounds = array<i64: 144, 128>}]} {
    %c0 = arith.constant 0 : index
    %c0_0 = arith.constant 0 : index
    %0 = vector.load %arg1[%c0, %c0_0] : memref<144x128xf32, #tpu.memory_space<vmem>>, vector<144x128xf32>
    %1 = arith.mulf %0, %0 : vector<144x128xf32>
    %c0_1 = arith.constant 0 : index
    %c0_2 = arith.constant 0 : index
    %2 = vector.load %arg2[%c0_1, %c0_2] : memref<128x128xf32, #tpu.memory_space<vmem>>, vector<128x128xf32>
    %cst = arith.constant dense<0.000000e+00> : vector<144x128xf32>
    %3 = tpu.matmul %1, %2, %cst {dimension_numbers = #tpu.dot_dimension_numbers<[1], [0], [0], [1], [0, 0, 1, 1], [], []>} : vector<144x128xf32>, vector<128x128xf32>, vector<144x128xf32> -> vector<144x128xf32>
    %cst_3 = arith.constant 9.99999996E-13 : f32
    %4 = vector.broadcast %cst_3 : f32 to vector<144x128xf32>
    %5 = arith.addf %3, %4 : vector<144x128xf32>
    %6 = math.rsqrt %5 : vector<144x128xf32>
    %7 = arith.mulf %3, %6 : vector<144x128xf32>
    %cst_4 = arith.constant 1.000000e+00 : f32
    %8 = vector.broadcast %cst_4 : f32 to vector<144x128xf32>
    %9 = arith.addf %8, %3 : vector<144x128xf32>
    %10 = tpu.reciprocal %9 {approx = true} : vector<144x128xf32> -> vector<144x128xf32>
    %11 = arith.mulf %7, %10 : vector<144x128xf32>
    %12 = arith.mulf %0, %11 : vector<144x128xf32>
    %c0_5 = arith.constant 0 : index
    %c0_6 = arith.constant 0 : index
    %13 = vector.load %arg3[%c0_5, %c0_6] : memref<144x128xf32, #tpu.memory_space<vmem>>, vector<144x128xf32>
    tpu.vector_store %arg3[%c0_5, %c0_6], %12 {strides = array<i32>} : memref<144x128xf32, #tpu.memory_space<vmem>>, vector<144x128xf32>,
    return
  }
  func.func @transform_0(%arg0: i32) -> (i32, i32) {
    %c0_i32 = arith.constant 0 : i32
    %c0_i32_0 = arith.constant 0 : i32
    return %arg0, %c0_i32 : i32, i32
  }
  func.func @transform_1(%arg0: i32) -> (i32, i32) {
    %c0_i32 = arith.constant 0 : i32
    %c0_i32_0 = arith.constant 0 : i32
    %c0_i32_1 = arith.constant 0 : i32
    return %c0_i32, %c0_i32_0 : i32, i32
  }
  func.func @transform_2(%arg0: i32) -> (i32, i32) {
    %c0_i32 = arith.constant 0 : i32
    %c0_i32_0 = arith.constant 0 : i32
    return %arg0, %c0_i32 : i32, i32
  }
}

</mosaic_0001>

<llo_original>
// kernel: primary_caps_forward.2
$region0: #{primary_caps_forward.2}
  #allocation0 [shape = 'u32[]', space=smem, size = 0x4, offset = 0x4, fixed_abs, tag = 'smem constant byte address 0x4 - core index']
  #allocation1 [shape = 'u32[144,128]{1,0:T(1,128)}', space=vmem, size = 0x12000, scoped, tag = 'internal scratch']
  #allocation2 [shape = 'f32[256,36]{1,0:T(8,128)}', space=vmem, size = 0x20000, scoped, tag = 'scratch operand']
  %s0 = inlined_call_operand.vmem [shape: bf16[256,2688], index: 0, kind: input, shape index: {}]
  %s1 = inlined_call_operand.vmem [shape: bf16[2,2688,36], index: 1, kind: input, shape index: {}]
  %s2 = inlined_call_operand.vmem [shape: f32[256,1], index: 2, kind: input, shape index: {}]
  %s3 = inlined_call_operand.vmem [shape: f32[2,256,36], index: 3, kind: output, shape index: {}]
  %s4 = sld [smem:[#allocation0]]
  $region79: #{primary_caps_forward.2} parent=0
    _
  %s6 = ssub.s32 1, %s4
  %s7 = scalar_select 0, %s6, %s4
  $region1: #{primary_caps_forward.2} parent=0
    #allocation3 [shape = 'u8[917504]{0}', space=vmem, size = 0xe0000, scoped, tag = 'input window, operand 0']
    loop: start=0, step=1, limit=8
    $region2: #{primary_caps_forward.2} parent=1 // loop_pre_header
      _
    $region3: #{primary_caps_forward.2} parent=1 // loop_header
      %s9 = sphi 0, %s13
      %p10 = scmp.ge.s32.totalorder %s9, 8
      %s16 = sphi 0, %s28
      %s17 = sphi 0, %s24
      %s18 = sphi 0, %s16
      %s19 = sphi 0, %s17
      %s20 = sphi 0, %s18
      %s21 = sphi 0, %s19
      %s31 = sphi 0, %s33
      %s34 = sphi 0, %s31
      %s35 = sphi 0, %s34
      %s51 = sphi 0, %s35
      %s59 = sphi 0, %s61
      %s62 = sphi 0, %s59
      %s63 = sphi 0, %s62
      %s79 = sphi 0, %s63
      %s83 = sphi 0, %s83
      %s85 = sphi 0, %s83
      %s86 = sphi 0, %s85
      %s100 = sphi 0, %s86
      %s106 = sphi 0, %s108
      %s109 = sphi 0, %s106
      %s110 = sphi 0, %s109
      %s126 = sphi 0, %s110
    $region4: #{primary_caps_forward.2} parent=1 // loop_header_branch
      %12 = sbr.rel (%p10) target = $region8
    $region5: #{primary_caps_forward.2} parent=1 // loop_body
      %s14 = ssub.s32 %s9, 1
      %s15 = ssub.s32 %s9, 2
      %s22 = sadd.s32 1, %s17
      %p23 = scmp.ge.s32.totalorder %s22, 3
      %s24 = scalar_select %p23, 0, %s22
      %s25 = sadd.s32 1, %s16
      %s26 = scalar_select %p23, %s25, %s16
      %p27 = scmp.ge.s32.totalorder %s26, 2
      %s28 = scalar_select %p27, 0, %s26
      %s29 = ssub.s32 %s17, %s24
      %p30 = scmp.eq.s32.totalorder %s29, 0
      %s32 = sadd.s32 %s31, 1
      %s33 = scalar_select %p30, %s31, %s32
      %p36 = pneg %p30
      %p37 = scmp.eq.s32.totalorder %s9, 5
      %p38 = por %p36, %p37
      %p39 = scmp.ne.s32.totalorder %s31, %s34
      %p40 = scmp.eq.s32.totalorder %s9, 0
      %p41 = por %p39, %p40
      %p42 = scmp.ne.s32.totalorder %s31, %s34
      %p43 = scmp.eq.s32.totalorder %s14, 5
      %p44 = por %p42, %p43
      %p45 = scmp.ne.s32.totalorder %s34, %s35
      %p46 = scmp.eq.s32.totalorder %s14, 0
      %p47 = por %p45, %p46
      %p48 = scmp.ne.s32.totalorder %s34, %s35
      %p49 = scmp.eq.s32.totalorder %s15, 5
      %p50 = por %p48, %p49
      %p52 = scmp.ne.s32.totalorder %s35, %s51
      %p53 = scmp.eq.s32.totalorder %s15, 0
      %p54 = por %p52, %p53
      %s55 = ssub.s32 %s16, %s28
      %s56 = ssub.s32 %s17, %s24
      %s57 = sor.u32 %s55, %s56
      %p58 = scmp.eq.s32.totalorder %s57, 0
      %s60 = sadd.s32 %s59, 1
      %s61 = scalar_select %p58, %s59, %s60
      %p64 = pneg %p58
      %p65 = scmp.eq.s32.totalorder %s9, 5
      %p66 = por %p64, %p65
      %p67 = scmp.ne.s32.totalorder %s59, %s62
      %p68 = scmp.eq.s32.totalorder %s9, 0
      %p69 = por %p67, %p68
      %p70 = scmp.ne.s32.totalorder %s59, %s62
      %p71 = scmp.eq.s32.totalorder %s14, 5
      %p72 = por %p70, %p71
      %p73 = scmp.ne.s32.totalorder %s62, %s63
      %p74 = scmp.eq.s32.totalorder %s14, 0
      %p75 = por %p73, %p74
      %p76 = scmp.ne.s32.totalorder %s62, %s63
      %p77 = scmp.eq.s32.totalorder %s15, 5
      %p78 = por %p76, %p77
      %p80 = scmp.ne.s32.totalorder %s63, %s79
      %p81 = scmp.eq.s32.totalorder %s15, 0
      %p82 = por %p80, %p81
      %s84 = sadd.s32 %s83, 1
      %p87 = scmp.eq.s32.totalorder %s9, 5
      %p88 = scmp.ne.s32.totalorder %s83, %s85
      %p89 = scmp.eq.s32.totalorder %s9, 0
      %p90 = por %p88, %p89
      %p91 = scmp.ne.s32.totalorder %s83, %s85
      %p92 = scmp.eq.s32.totalorder %s14, 5
      %p93 = por %p91, %p92
      %p94 = scmp.ne.s32.totalorder %s85, %s86
      %p95 = scmp.eq.s32.totalorder %s14, 0
      %p96 = por %p94, %p95
      %p97 = scmp.ne.s32.totalorder %s85, %s86
      %p98 = scmp.eq.s32.totalorder %s15, 5
      %p99 = por %p97, %p98
      %p101 = scmp.ne.s32.totalorder %s86, %s100
      %p102 = scmp.eq.s32.totalorder %s15, 0
      %p103 = por %p101, %p102
      %s104 = ssub.s32 %s16, %s28
      %p105 = scmp.eq.s32.totalorder %s104, 0
      %s107 = sadd.s32 %s106, 1
      %s108 = scalar_select %p105, %s106, %s107
      %p111 = pneg %p105
      %p112 = scmp.eq.s32.totalorder %s9, 5
      %p113 = por %p111, %p112
      %p114 = scmp.ne.s32.totalorder %s106, %s109
      %p115 = scmp.eq.s32.totalorder %s9, 0
      %p116 = por %p114, %p115
      %p117 = scmp.ne.s32.totalorder %s106, %s109
      %p118 = scmp.eq.s32.totalorder %s14, 5
      %p119 = por %p117, %p118
      %p120 = scmp.ne.s32.totalorder %s109, %s110
      %p121 = scmp.eq.s32.totalorder %s14, 0
      %p122 = por %p120, %p121
      %p123 = scmp.ne.s32.totalorder %s109, %s110
      %p124 = scmp.eq.s32.totalorder %s15, 5
      %p125 = por %p123, %p124
      %p127 = scmp.ne.s32.totalorder %s110, %s126
      %p128 = scmp.eq.s32.totalorder %s15, 0
      %p129 = por %p127, %p128
      %p130 = scmp.le.s32.totalorder 1, %s9
      %p131 = scmp.lt.s32.totalorder %s9, 7
      %p132 = pnand %p130, %p131
      %p133 = pneg %p132
      // Predicated region
      $region9: #{primary_caps_forward.2} parent=5 // pred_check
        _
      $region10: #{primary_caps_forward.2} parent=5 // pred_check_branch
        %135 = sbr.rel (%p132) target = $region12
      $region11: #{primary_caps_forward.2} parent=5 // pred_region
        %s136 = ssub.s32 %s9, 1
        // Predicated region
        $region13: #{primary_caps_forward.2} parent=11 // pred_check
          %p137 = pneg %p96
        $region14: #{primary_caps_forward.2} parent=11 // pred_check_branch
          %139 = sbr.rel (%p137) target = $region16
        $region15: #{primary_caps_forward.2} parent=11 // pred_region
          _
        $region16: #{primary_caps_forward.2} parent=11 // pred_fallthru
          _
      $region12: #{primary_caps_forward.2} parent=5 // pred_fallthru
        _
      %p140 = scmp.lt.s32.totalorder %s9, 6
      // Predicated region
      $region17: #{primary_caps_forward.2} parent=5 // pred_check
        %p141 = pneg %p140
      $region18: #{primary_caps_forward.2} parent=5 // pred_check_branch
        %143 = sbr.rel (%p141) target = $region20
      $region19: #{primary_caps_forward.2} parent=5 // pred_region
        // Predicated region
        $region21: #{primary_caps_forward.2} parent=19 // pred_check
          %p144 = pneg %p41
        $region22: #{primary_caps_forward.2} parent=19 // pred_check_branch
          %146 = sbr.rel (%p144) target = $region24
        $region23: #{primary_caps_forward.2} parent=19 // pred_region
          %s147 = sand.u32 %s31, 1
          %s148 = sand.u32 %s31, 1
          %s149 = smul.addr %s148, 896
          %s150 = scalar_lea.vmem [#allocation3], %s149
          %s151 = smul.u32 7, %s17
          %s152 = smul.addr %s151, 4
          %s153 = scalar_lea.vmem %s0, %s152
          // Predicated region
          $region25: #{primary_caps_forward.2} parent=23 // pred_check
            _
          $region26: #{primary_caps_forward.2} parent=23 // pred_check_branch
            %155 = sbr.rel (0) target = $region28
          $region27: #{primary_caps_forward.2} parent=23 // pred_region
            // Predicated region
            $region29: #{primary_caps_forward.2} parent=27 // pred_check
              _
            $region30: #{primary_caps_forward.2} parent=27 // pred_check_branch
              %157 = sbr.rel (0) target = $region32
            $region31: #{primary_caps_forward.2} parent=27 // pred_region
              %s158 = scalar_lea.vmem %s153, 24
              %s159 = scalar_lea.vmem %s150, 24 [#allocation3]
              loop: start=0, step=1, limit=1
              $region33: #{primary_caps_forward.2} parent=31 // loop_pre_header
                _
              $region34: #{primary_caps_forward.2} parent=31 // loop_header
                %s161 = sphi 0, %s165
                %p162 = scmp.ge.s32.totalorder %s161, 1
                %s166 = sphi %s153, %s153
                %s167 = sphi %s150, %s150
              $region35: #{primary_caps_forward.2} parent=31 // loop_header_branch
                %164 = sbr.rel (%p162) target = $region39
              $region36: #{primary_caps_forward.2} parent=31 // loop_body
                %v168 = vld [vmem:[%s166] sm:$0xff]
                %169 = vst [vmem:[%s167] sm:$0xff] %v168
                %v170 = vld [vmem:[%s166 + $0x8] sm:$0xff]
                %171 = vst [vmem:[%s167 + $0x8] sm:$0xff] %v170
                %v172 = vld [vmem:[%s166 + $0x10] sm:$0xff]
                %173 = vst [vmem:[%s167 + $0x10] sm:$0xff] %v172
                %v174 = vld [vmem:[%s166 + $0x54] sm:$0xff]
                %175 = vst [vmem:[%s167 + $0x1c] sm:$0xff] %v174
                %v176 = vld [vmem:[%s166 + $0x5c] sm:$0xff]
                %177 = vst [vmem:[%s167 + $0x24] sm:$0xff] %v176
                %v178 = vld [vmem:[%s166 + $0x64] sm:$0xff]
                %179 = vst [vmem:[%s167 + $0x2c] sm:$0xff] %v178
                %v180 = vld [vmem:[%s166 + $0xa8] sm:$0xff]
                %181 = vst [vmem:[%s167 + $0x38] sm:$0xff] %v180
                %v182 = vld [vmem:[%s166 + $0xb0] sm:$0xff]
                %183 = vst [vmem:[%s167 + $0x40] sm:$0xff] %v182
                %v184 = vld [vmem:[%s166 + $0xb8] sm:$0xff]
                %185 = vst [vmem:[%s167 + $0x48] sm:$0xff] %v184
                %v186 = vld [vmem:[%s166 + $0xfc] sm:$0xff]
                %187 = vst [vmem:[%s167 + $0x54] sm:$0xff] %v186
                %v188 = vld [vmem:[%s166 + $0x104] sm:$0xff]
                %189 = vst [vmem:[%s167 + $0x5c] sm:$0xff] %v188
                %v190 = vld [vmem:[%s166 + $0x10c] sm:$0xff]
                %191 = vst [vmem:[%s167 + $0x64] sm:$0xff] %v190
                %v192 = vld [vmem:[%s166 + $0x150] sm:$0xff]
                %193 = vst [vmem:[%s167 + $0x70] sm:$0xff] %v192
                %v194 = vld [vmem:[%s166 + $0x158] sm:$0xff]
                %195 = vst [vmem:[%s167 + $0x78] sm:$0xff] %v194
                %v196 = vld [vmem:[%s166 + $0x160] sm:$0xff]
                %197 = vst [vmem:[%s167 + $0x80] sm:$0xff] %v196
                %v198 = vld [vmem:[%s166 + $0x1a4] sm:$0xff]
                %199 = vst [vmem:[%s167 + $0x8c] sm:$0xff] %v198
                %v200 = vld [vmem:[%s166 + $0x1ac] sm:$0xff]
                %201 = vst [vmem:[%s167 + $0x94] sm:$0xff] %v200
                %v202 = vld [vmem:[%s166 + $0x1b4] sm:$0xff]
                %203 = vst [vmem:[%s167 + $0x9c] sm:$0xff] %v202
                %v204 = vld [vmem:[%s166 + $0x1f8] sm:$0xff]
                %205 = vst [vmem:[%s167 + $0xa8] sm:$0xff] %v204
                %v206 = vld [vmem:[%s166 + $0x200] sm:$0xff]
                %207 = vst [vmem:[%s167 + $0xb0] sm:$0xff] %v206
                %v208 = vld [vmem:[%s166 + $0x208] sm:$0xff]
                %209 = vst [vmem:[%s167 + $0xb8] sm:$0xff] %v208
                %v210 = vld [vmem:[%s166 + $0x24c] sm:$0xff]
                %211 = vst [vmem:[%s167 + $0xc4] sm:$0xff] %v210
                %v212 = vld [vmem:[%s166 + $0x254] sm:$0xff]
                %213 = vst [vmem:[%s167 + $0xcc] sm:$0xff] %v212
                %v214 = vld [vmem:[%s166 + $0x25c] sm:$0xff]
                %215 = vst [vmem:[%s167 + $0xd4] sm:$0xff] %v214
                %v216 = vld [vmem:[%s166 + $0x2a0] sm:$0xff]
                %217 = vst [vmem:[%s167 + $0xe0] sm:$0xff] %v216
                %v218 = vld [vmem:[%s166 + $0x2a8] sm:$0xff]
                %219 = vst [vmem:[%s167 + $0xe8] sm:$0xff] %v218
                %v220 = vld [vmem:[%s166 + $0x2b0] sm:$0xff]
                %221 = vst [vmem:[%s167 + $0xf0] sm:$0xff] %v220
                %v222 = vld [vmem:[%s166 + $0x2f4] sm:$0xff]
                %223 = vst [vmem:[%s167 + $0xfc] sm:$0xff] %v222
                %v224 = vld [vmem:[%s166 + $0x2fc] sm:$0xff]
                %225 = vst [vmem:[%s167 + $0x104] sm:$0xff] %v224
                %v226 = vld [vmem:[%s166 + $0x304] sm:$0xff]
                %227 = vst [vmem:[%s167 + $0x10c] sm:$0xff] %v226
                %v228 = vld [vmem:[%s166 + $0x348] sm:$0xff]
                %229 = vst [vmem:[%s167 + $0x118] sm:$0xff] %v228
                %v230 = vld [vmem:[%s166 + $0x350] sm:$0xff]
                %231 = vst [vmem:[%s167 + $0x120] sm:$0xff] %v230
                %v232 = vld [vmem:[%s166 + $0x358] sm:$0xff]
                %233 = vst [vmem:[%s167 + $0x128] sm:$0xff] %v232
                %v234 = vld [vmem:[%s166 + $0x39c] sm:$0xff]
                %235 = vst [vmem:[%s167 + $0x134] sm:$0xff] %v234
                %v236 = vld [vmem:[%s166 + $0x3a4] sm:$0xff]
                %237 = vst [vmem:[%s167 + $0x13c] sm:$0xff] %v236
                %v238 = vld [vmem:[%s166 + $0x3ac] sm:$0xff]
                %239 = vst [vmem:[%s167 + $0x144] sm:$0xff] %v238
                %v240 = vld [vmem:[%s166 + $0x3f0] sm:$0xff]
                %241 = vst [vmem:[%s167 + $0x150] sm:$0xff] %v240
                %v242 = vld [vmem:[%s166 + $0x3f8] sm:$0xff]
                %243 = vst [vmem:[%s167 + $0x158] sm:$0xff] %v242
                %v244 = vld [vmem:[%s166 + $0x400] sm:$0xff]
                %245 = vst [vmem:[%s167 + $0x160] sm:$0xff] %v244
                %v246 = vld [vmem:[%s166 + $0x444] sm:$0xff]
                %247 = vst [vmem:[%s167 + $0x16c] sm:$0xff] %v246
                %v248 = vld [vmem:[%s166 + $0x44c] sm:$0xff]
                %249 = vst [vmem:[%s167 + $0x174] sm:$0xff] %v248
                %v250 = vld [vmem:[%s166 + $0x454] sm:$0xff]
                %251 = vst [vmem:[%s167 + $0x17c] sm:$0xff] %v250
                %v252 = vld [vmem:[%s166 + $0x498] sm:$0xff]
                %253 = vst [vmem:[%s167 + $0x188] sm:$0xff] %v252
                %v254 = vld [vmem:[%s166 + $0x4a0] sm:$0xff]
                %255 = vst [vmem:[%s167 + $0x190] sm:$0xff] %v254
                %v256 = vld [vmem:[%s166 + $0x4a8] sm:$0xff]
                %257 = vst [vmem:[%s167 + $0x198] sm:$0xff] %v256
                %v258 = vld [vmem:[%s166 + $0x4ec] sm:$0xff]
                %259 = vst [vmem:[%s167 + $0x1a4] sm:$0xff] %v258
                %v260 = vld [vmem:[%s166 + $0x4f4] sm:$0xff]
                %261 = vst [vmem:[%s167 + $0x1ac] sm:$0xff] %v260
                %v262 = vld [vmem:[%s166 + $0x4fc] sm:$0xff]
                %263 = vst [vmem:[%s167 + $0x1b4] sm:$0xff] %v262
                %v264 = vld [vmem:[%s166 + $0x540] sm:$0xff]
                %265 = vst [vmem:[%s167 + $0x1c0] sm:$0xff] %v264
                %v266 = vld [vmem:[%s166 + $0x548] sm:$0xff]
                %267 = vst [vmem:[%s167 + $0x1c8] sm:$0xff] %v266
                %v268 = vld [vmem:[%s166 + $0x550] sm:$0xff]
                %269 = vst [vmem:[%s167 + $0x1d0] sm:$0xff] %v268
                %v270 = vld [vmem:[%s166 + $0x594] sm:$0xff]
                %271 = vst [vmem:[%s167 + $0x1dc] sm:$0xff] %v270
                %v272 = vld [vmem:[%s166 + $0x59c] sm:$0xff]
                %273 = vst [vmem:[%s167 + $0x1e4] sm:$0xff] %v272
                %v274 = vld [vmem:[%s166 + $0x5a4] sm:$0xff]
                %275 = vst [vmem:[%s167 + $0x1ec] sm:$0xff] %v274
                %v276 = vld [vmem:[%s166 + $0x5e8] sm:$0xff]
                %277 = vst [vmem:[%s167 + $0x1f8] sm:$0xff] %v276
                %v278 = vld [vmem:[%s166 + $0x5f0] sm:$0xff]
                %279 = vst [vmem:[%s167 + $0x200] sm:$0xff] %v278
                %v280 = vld [vmem:[%s166 + $0x5f8] sm:$0xff]
                %281 = vst [vmem:[%s167 + $0x208] sm:$0xff] %v280
                %v282 = vld [vmem:[%s166 + $0x63c] sm:$0xff]
                %283 = vst [vmem:[%s167 + $0x214] sm:$0xff] %v282
                %v284 = vld [vmem:[%s166 + $0x644] sm:$0xff]
                %285 = vst [vmem:[%s167 + $0x21c] sm:$0xff] %v284
                %v286 = vld [vmem:[%s166 + $0x64c] sm:$0xff]
                %287 = vst [vmem:[%s167 + $0x224] sm:$0xff] %v286
                %v288 = vld [vmem:[%s166 + $0x690] sm:$0xff]
                %289 = vst [vmem:[%s167 + $0x230] sm:$0xff] %v288
                %v290 = vld [vmem:[%s166 + $0x698] sm:$0xff]
                %291 = vst [vmem:[%s167 + $0x238] sm:$0xff] %v290
                %v292 = vld [vmem:[%s166 + $0x6a0] sm:$0xff]
                %293 = vst [vmem:[%s167 + $0x240] sm:$0xff] %v292
                %v294 = vld [vmem:[%s166 + $0x6e4] sm:$0xff]
                %295 = vst [vmem:[%s167 + $0x24c] sm:$0xff] %v294
                %v296 = vld [vmem:[%s166 + $0x6ec] sm:$0xff]
                %297 = vst [vmem:[%s167 + $0x254] sm:$0xff] %v296
                %v298 = vld [vmem:[%s166 + $0x6f4] sm:$0xff]
                %299 = vst [vmem:[%s167 + $0x25c] sm:$0xff] %v298
                %v300 = vld [vmem:[%s166 + $0x738] sm:$0xff]
                %301 = vst [vmem:[%s167 + $0x268] sm:$0xff] %v300
                %v302 = vld [vmem:[%s166 + $0x740] sm:$0xff]
                %303 = vst [vmem:[%s167 + $0x270] sm:$0xff] %v302
                %v304 = vld [vmem:[%s166 + $0x748] sm:$0xff]
                %305 = vst [vmem:[%s167 + $0x278] sm:$0xff] %v304
                %v306 = vld [vmem:[%s166 + $0x78c] sm:$0xff]
                %307 = vst [vmem:[%s167 + $0x284] sm:$0xff] %v306
                %v308 = vld [vmem:[%s166 + $0x794] sm:$0xff]
                %309 = vst [vmem:[%s167 + $0x28c] sm:$0xff] %v308
                %v310 = vld [vmem:[%s166 + $0x79c] sm:$0xff]
                %311 = vst [vmem:[%s167 + $0x294] sm:$0xff] %v310
                %v312 = vld [vmem:[%s166 + $0x7e0] sm:$0xff]
                %313 = vst [vmem:[%s167 + $0x2a0] sm:$0xff] %v312
                %v314 = vld [vmem:[%s166 + $0x7e8] sm:$0xff]
                %315 = vst [vmem:[%s167 + $0x2a8] sm:$0xff] %v314
                %v316 = vld [vmem:[%s166 + $0x7f0] sm:$0xff]
                %317 = vst [vmem:[%s167 + $0x2b0] sm:$0xff] %v316
                %v318 = vld [vmem:[%s166 + $0x834] sm:$0xff]
                %319 = vst [vmem:[%s167 + $0x2bc] sm:$0xff] %v318
                %v320 = vld [vmem:[%s166 + $0x83c] sm:$0xff]
                %321 = vst [vmem:[%s167 + $0x2c4] sm:$0xff] %v320
                %v322 = vld [vmem:[%s166 + $0x844] sm:$0xff]
                %323 = vst [vmem:[%s167 + $0x2cc] sm:$0xff] %v322
                %v324 = vld [vmem:[%s166 + $0x888] sm:$0xff]
                %325 = vst [vmem:[%s167 + $0x2d8] sm:$0xff] %v324
                %v326 = vld [vmem:[%s166 + $0x890] sm:$0xff]
                %327 = vst [vmem:[%s167 + $0x2e0] sm:$0xff] %v326
                %v328 = vld [vmem:[%s166 + $0x898] sm:$0xff]
                %329 = vst [vmem:[%s167 + $0x2e8] sm:$0xff] %v328
                %v330 = vld [vmem:[%s166 + $0x8dc] sm:$0xff]
                %331 = vst [vmem:[%s167 + $0x2f4] sm:$0xff] %v330
                %v332 = vld [vmem:[%s166 + $0x8e4] sm:$0xff]
                %333 = vst [vmem:[%s167 + $0x2fc] sm:$0xff] %v332
                %v334 = vld [vmem:[%s166 + $0x8ec] sm:$0xff]
                %335 = vst [vmem:[%s167 + $0x304] sm:$0xff] %v334
                %v336 = vld [vmem:[%s166 + $0x930] sm:$0xff]
                %337 = vst [vmem:[%s167 + $0x310] sm:$0xff] %v336
                %v338 = vld [vmem:[%s166 + $0x938] sm:$0xff]
                %339 = vst [vmem:[%s167 + $0x318] sm:$0xff] %v338
                %v340 = vld [vmem:[%s166 + $0x940] sm:$0xff]
                %341 = vst [vmem:[%s167 + $0x320] sm:$0xff] %v340
                %v342 = vld [vmem:[%s166 + $0x984] sm:$0xff]
                %343 = vst [vmem:[%s167 + $0x32c] sm:$0xff] %v342
                %v344 = vld [vmem:[%s166 + $0x98c] sm:$0xff]
                %345 = vst [vmem:[%s167 + $0x334] sm:$0xff] %v344
                %v346 = vld [vmem:[%s166 + $0x994] sm:$0xff]
                %347 = vst [vmem:[%s167 + $0x33c] sm:$0xff] %v346
                %v348 = vld [vmem:[%s166 + $0x9d8] sm:$0xff]
                %349 = vst [vmem:[%s167 + $0x348] sm:$0xff] %v348
                %v350 = vld [vmem:[%s166 + $0x9e0] sm:$0xff]
                %351 = vst [vmem:[%s167 + $0x350] sm:$0xff] %v350
                %v352 = vld [vmem:[%s166 + $0x9e8] sm:$0xff]
                %353 = vst [vmem:[%s167 + $0x358] sm:$0xff] %v352
                %v354 = vld [vmem:[%s166 + $0xa2c] sm:$0xff]
                %355 = vst [vmem:[%s167 + $0x364] sm:$0xff] %v354
                %v356 = vld [vmem:[%s166 + $0xa34] sm:$0xff]
                %357 = vst [vmem:[%s167 + $0x36c] sm:$0xff] %v356
                %v358 = vld [vmem:[%s166 + $0xa3c] sm:$0xff]
                %359 = vst [vmem:[%s167 + $0x374] sm:$0xff] %v358
              $region37: #{primary_caps_forward.2} parent=31 // loop_footer
                %s165 = sadd.s32 1, %s161
              $region38: #{primary_caps_forward.2} parent=31 // loop_footer_branch
                %160 = sbr.rel target = $region34
              $region39: #{primary_caps_forward.2} parent=31 // loop_exit
                _
              loop: start=0, step=1, limit=1
              $region40: #{primary_caps_forward.2} parent=31 // loop_pre_header
                _
              $region41: #{primary_caps_forward.2} parent=31 // loop_header
                %s362 = sphi 0, %s366
                %p363 = scmp.ge.s32.totalorder %s362, 1
                %s367 = sphi %s158, %s158
                %s368 = sphi %s159, %s159
              $region42: #{primary_caps_forward.2} parent=31 // loop_header_branch
                %365 = sbr.rel (%p363) target = $region46
              $region43: #{primary_caps_forward.2} parent=31 // loop_body
                %v369 = vld [vmem:[%s367] sm:$0xf]
                %370 = vst [vmem:[%s368] sm:$0xf] %v369
                %v371 = vld [vmem:[%s367 + $0x54] sm:$0xf]
                %372 = vst [vmem:[%s368 + $0x1c] sm:$0xf] %v371
                %v373 = vld [vmem:[%s367 + $0xa8] sm:$0xf]
                %374 = vst [vmem:[%s368 + $0x38] sm:$0xf] %v373
                %v375 = vld [vmem:[%s367 + $0xfc] sm:$0xf]
                %376 = vst [vmem:[%s368 + $0x54] sm:$0xf] %v375
                %v377 = vld [vmem:[%s367 + $0x150] sm:$0xf]
                %378 = vst [vmem:[%s368 + $0x70] sm:$0xf] %v377
                %v379 = vld [vmem:[%s367 + $0x1a4] sm:$0xf]
                %380 = vst [vmem:[%s368 + $0x8c] sm:$0xf] %v379
                %v381 = vld [vmem:[%s367 + $0x1f8] sm:$0xf]
                %382 = vst [vmem:[%s368 + $0xa8] sm:$0xf] %v381
                %v383 = vld [vmem:[%s367 + $0x24c] sm:$0xf]
                %384 = vst [vmem:[%s368 + $0xc4] sm:$0xf] %v383
                %v385 = vld [vmem:[%s367 + $0x2a0] sm:$0xf]
                %386 = vst [vmem:[%s368 + $0xe0] sm:$0xf] %v385
                %v387 = vld [vmem:[%s367 + $0x2f4] sm:$0xf]
                %388 = vst [vmem:[%s368 + $0xfc] sm:$0xf] %v387
                %v389 = vld [vmem:[%s367 + $0x348] sm:$0xf]
                %390 = vst [vmem:[%s368 + $0x118] sm:$0xf] %v389
                %v391 = vld [vmem:[%s367 + $0x39c] sm:$0xf]
                %392 = vst [vmem:[%s368 + $0x134] sm:$0xf] %v391
                %v393 = vld [vmem:[%s367 + $0x3f0] sm:$0xf]
                %394 = vst [vmem:[%s368 + $0x150] sm:$0xf] %v393
                %v395 = vld [vmem:[%s367 + $0x444] sm:$0xf]
                %396 = vst [vmem:[%s368 + $0x16c] sm:$0xf] %v395
                %v397 = vld [vmem:[%s367 + $0x498] sm:$0xf]
                %398 = vst [vmem:[%s368 + $0x188] sm:$0xf] %v397
                %v399 = vld [vmem:[%s367 + $0x4ec] sm:$0xf]
                %400 = vst [vmem:[%s368 + $0x1a4] sm:$0xf] %v399
                %v401 = vld [vmem:[%s367 + $0x540] sm:$0xf]
                %402 = vst [vmem:[%s368 + $0x1c0] sm:$0xf] %v401
                %v403 = vld [vmem:[%s367 + $0x594] sm:$0xf]
                %404 = vst [vmem:[%s368 + $0x1dc] sm:$0xf] %v403
                %v405 = vld [vmem:[%s367 + $0x5e8] sm:$0xf]
                %406 = vst [vmem:[%s368 + $0x1f8] sm:$0xf] %v405
                %v407 = vld [vmem:[%s367 + $0x63c] sm:$0xf]
                %408 = vst [vmem:[%s368 + $0x214] sm:$0xf] %v407
                %v409 = vld [vmem:[%s367 + $0x690] sm:$0xf]
                %410 = vst [vmem:[%s368 + $0x230] sm:$0xf] %v409
                %v411 = vld [vmem:[%s367 + $0x6e4] sm:$0xf]
                %412 = vst [vmem:[%s368 + $0x24c] sm:$0xf] %v411
                %v413 = vld [vmem:[%s367 + $0x738] sm:$0xf]
                %414 = vst [vmem:[%s368 + $0x268] sm:$0xf] %v413
                %v415 = vld [vmem:[%s367 + $0x78c] sm:$0xf]
                %416 = vst [vmem:[%s368 + $0x284] sm:$0xf] %v415
                %v417 = vld [vmem:[%s367 + $0x7e0] sm:$0xf]
                %418 = vst [vmem:[%s368 + $0x2a0] sm:$0xf] %v417
                %v419 = vld [vmem:[%s367 + $0x834] sm:$0xf]
                %420 = vst [vmem:[%s368 + $0x2bc] sm:$0xf] %v419
                %v421 = vld [vmem:[%s367 + $0x888] sm:$0xf]
                %422 = vst [vmem:[%s368 + $0x2d8] sm:$0xf] %v421
                %v423 = vld [vmem:[%s367 + $0x8dc] sm:$0xf]
                %424 = vst [vmem:[%s368 + $0x2f4] sm:$0xf] %v423
                %v425 = vld [vmem:[%s367 + $0x930] sm:$0xf]
                %426 = vst [vmem:[%s368 + $0x310] sm:$0xf] %v425
                %v427 = vld [vmem:[%s367 + $0x984] sm:$0xf]
                %428 = vst [vmem:[%s368 + $0x32c] sm:$0xf] %v427
                %v429 = vld [vmem:[%s367 + $0x9d8] sm:$0xf]
                %430 = vst [vmem:[%s368 + $0x348] sm:$0xf] %v429
                %v431 = vld [vmem:[%s367 + $0xa2c] sm:$0xf]
                %432 = vst [vmem:[%s368 + $0x364] sm:$0xf] %v431
              $region44: #{primary_caps_forward.2} parent=31 // loop_footer
                %s366 = sadd.s32 1, %s362
              $region45: #{primary_caps_forward.2} parent=31 // loop_footer_branch
                %361 = sbr.rel target = $region41
              $region46: #{primary_caps_forward.2} parent=31 // loop_exit
                _
            $region32: #{primary_caps_forward.2} parent=27 // pred_fallthru
              _
          $region28: #{primary_caps_forward.2} parent=23 // pred_fallthru
            _
          %433 = vnop
        $region24: #{primary_caps_forward.2} parent=19 // pred_fallthru
          _
        // Predicated region
        $region47: #{primary_caps_forward.2} parent=19 // pred_check
          %p434 = pneg %p69
        $region48: #{primary_caps_forward.2} parent=19 // pred_check_branch
          %436 = sbr.rel (%p434) target = $region50
        $region49: #{primary_caps_forward.2} parent=19 // pred_region
          %s437 = smul.u32 112, %s17
          %p438 = scmp.lt.s32.totalorder %s16, 1
          %s439 = scalar_select %p438, %s16, 1
          %p440 = scmp.lt.s32.totalorder %s437, 335
          %s441 = scalar_select %p440, %s437, 335
          %s442 = smul.addr %s439, 336
          %s443 = sadd.s32 %s441, %s442
          %s444 = smul.addr %s443, 4
          %s445 = scalar_lea.vmem %s1, %s444
          %s446 = smul.u32 112, %s17
        $region50: #{primary_caps_forward.2} parent=19 // pred_fallthru
          _
      $region20: #{primary_caps_forward.2} parent=5 // pred_fallthru
        _
      %p447 = scmp.le.s32.totalorder 1, %s9
      %p448 = scmp.lt.s32.totalorder %s9, 7
      %p449 = pnand %p447, %p448
      %p450 = pneg %p449
      // Predicated region
      $region51: #{primary_caps_forward.2} parent=5 // pred_check
        _
      $region52: #{primary_caps_forward.2} parent=5 // pred_check_branch
        %452 = sbr.rel (%p449) target = $region54
      $region53: #{primary_caps_forward.2} parent=5 // pred_region
        %s453 = ssub.s32 %s9, 1
        %s454 = sand.u32 %s34, 1
        %s455 = sand.u32 %s34, 1
        %s456 = smul.addr %s455, 896
        %s457 = scalar_lea.vmem [#allocation3], %s456
        // Predicated region
        $region55: #{primary_caps_forward.2} parent=53 // pred_check
          %p458 = pneg %p47
        $region56: #{primary_caps_forward.2} parent=53 // pred_check_branch
          %460 = sbr.rel (%p458) target = $region58
        $region57: #{primary_caps_forward.2} parent=53 // pred_region
          _
        $region58: #{primary_caps_forward.2} parent=53 // pred_fallthru
          _
        %s461 = sand.u32 %s34, 1
        %s462 = sand.u32 %s34, 1
        %s463 = smul.addr %s462, 896
        %s464 = scalar_lea.vmem [#allocation3], %s463
        %p465 = pneg %p47
        %p466 = pneg %p44
        %s467 = smul.u32 112, %s19
        %p468 = scmp.lt.s32.totalorder %s18, 1
        %s469 = scalar_select %p468, %s18, 1
        %p470 = scmp.lt.s32.totalorder %s467, 335
        %s471 = scalar_select %p470, %s467, 335
        %s472 = smul.addr %s469, 336
        %s473 = sadd.s32 %s471, %s472
        %s474 = smul.addr %s473, 4
        %s475 = scalar_lea.vmem %s1, %s474
        %p476 = pneg %p75
        %p477 = pneg %p72
        %p478 = pneg %p96
        %p479 = pneg %p93
        %p480 = pneg %p122
        %p481 = pneg %p119
        %p482 = scmp.lt.s32.totalorder %s18, 1
        %s483 = scalar_select %p482, %s18, 1
        %s484 = smul.addr %s483, 32
        %s485 = smul.addr %s484, 8
        %s486 = scalar_lea.vmem %s3, %s485
        %s487 = smul.u32 7, %s19
        %s488 = smul.u32 112, %s19
        %p489 = scmp.lt.s32.totalorder %s18, 1
        %s490 = scalar_select %p489, %s18, 1
        %p491 = scmp.lt.s32.totalorder %s488, 335
        %s492 = scalar_select %p491, %s488, 335
        %s493 = smul.addr %s490, 336
        %s494 = sadd.s32 %s492, %s493
        %s495 = smul.addr %s494, 4
        %s496 = scalar_lea.vmem %s1, %s495
        %s497 = smul.u32 112, %s19
        %p498 = scmp.lt.s32.totalorder %s18, 1
        %s499 = scalar_select %p498, %s18, 1
        %s500 = smul.addr %s499, 32
        %s501 = smul.addr %s500, 8
        %s502 = scalar_lea.vmem %s3, %s501
        %p504 = scmp.eq.s32.totalorder %s19, 0
        // Predicated region
        $region59: #{primary_caps_forward.2} parent=53 // pred_check
          %p505 = pneg %p504
        $region60: #{primary_caps_forward.2} parent=53 // pred_check_branch
          %507 = sbr.rel (%p505) target = $region62
        $region61: #{primary_caps_forward.2} parent=53 // pred_region
          %vm508 = vcmask 293888
          %509 = vst.msk [vmem:[#allocation2] sm:$0xff] %vm508, 0.0
          %510 = vst.msk [vmem:[#allocation2 + $0x8] sm:$0xff] %vm508, 0.0
          %511 = vst.msk [vmem:[#allocation2 + $0x10] sm:$0xff] %vm508, 0.0
          %512 = vst.msk [vmem:[#allocation2 + $0x18] sm:$0xff] %vm508, 0.0
          %513 = vst.msk [vmem:[#allocation2 + $0x20] sm:$0xff] %vm508, 0.0
          %514 = vst.msk [vmem:[#allocation2 + $0x28] sm:$0xff] %vm508, 0.0
          %515 = vst.msk [vmem:[#allocation2 + $0x30] sm:$0xff] %vm508, 0.0
          %516 = vst.msk [vmem:[#allocation2 + $0x38] sm:$0xff] %vm508, 0.0
          %517 = vst.msk [vmem:[#allocation2 + $0x40] sm:$0xff] %vm508, 0.0
          %518 = vst.msk [vmem:[#allocation2 + $0x48] sm:$0xff] %vm508, 0.0
          %519 = vst.msk [vmem:[#allocation2 + $0x50] sm:$0xff] %vm508, 0.0
          %520 = vst.msk [vmem:[#allocation2 + $0x58] sm:$0xff] %vm508, 0.0
          %521 = vst.msk [vmem:[#allocation2 + $0x60] sm:$0xff] %vm508, 0.0
          %522 = vst.msk [vmem:[#allocation2 + $0x68] sm:$0xff] %vm508, 0.0
          %523 = vst.msk [vmem:[#allocation2 + $0x70] sm:$0xff] %vm508, 0.0
          %524 = vst.msk [vmem:[#allocation2 + $0x78] sm:$0xff] %vm508, 0.0
          %525 = vst.msk [vmem:[#allocation2 + $0x80] sm:$0xff] %vm508, 0.0
          %526 = vst.msk [vmem:[#allocation2 + $0x88] sm:$0xff] %vm508, 0.0
          %527 = vst.msk [vmem:[#allocation2 + $0x90] sm:$0xff] %vm508, 0.0
          %528 = vst.msk [vmem:[#allocation2 + $0x98] sm:$0xff] %vm508, 0.0
          %529 = vst.msk [vmem:[#allocation2 + $0xa0] sm:$0xff] %vm508, 0.0
          %530 = vst.msk [vmem:[#allocation2 + $0xa8] sm:$0xff] %vm508, 0.0
          %531 = vst.msk [vmem:[#allocation2 + $0xb0] sm:$0xff] %vm508, 0.0
          %532 = vst.msk [vmem:[#allocation2 + $0xb8] sm:$0xff] %vm508, 0.0
          %533 = vst.msk [vmem:[#allocation2 + $0xc0] sm:$0xff] %vm508, 0.0
          %534 = vst.msk [vmem:[#allocation2 + $0xc8] sm:$0xff] %vm508, 0.0
          %535 = vst.msk [vmem:[#allocation2 + $0xd0] sm:$0xff] %vm508, 0.0
          %536 = vst.msk [vmem:[#allocation2 + $0xd8] sm:$0xff] %vm508, 0.0
          %537 = vst.msk [vmem:[#allocation2 + $0xe0] sm:$0xff] %vm508, 0.0
          %538 = vst.msk [vmem:[#allocation2 + $0xe8] sm:$0xff] %vm508, 0.0
          %539 = vst.msk [vmem:[#allocation2 + $0xf0] sm:$0xff] %vm508, 0.0
          %540 = vst.msk [vmem:[#allocation2 + $0xf8] sm:$0xff] %vm508, 0.0
        $region62: #{primary_caps_forward.2} parent=53 // pred_fallthru
          _
        %v541 = vld [vmem:[#allocation2] sm:$0xff]
        %v542 = vld [vmem:[#allocation2 + $0x8] sm:$0xff]
        %v543 = vld [vmem:[#allocation2 + $0x10] sm:$0xff]
        %v544 = vld [vmem:[#allocation2 + $0x18] sm:$0xff]
        %v545 = vld [vmem:[#allocation2 + $0x20] sm:$0xff]
        %v546 = vld [vmem:[#allocation2 + $0x28] sm:$0xff]
        %v547 = vld [vmem:[#allocation2 + $0x30] sm:$0xff]
        %v548 = vld [vmem:[#allocation2 + $0x38] sm:$0xff]
        %v549 = vld [vmem:[#allocation2 + $0x40] sm:$0xff]
        %v550 = vld [vmem:[#allocation2 + $0x48] sm:$0xff]
        %v551 = vld [vmem:[#allocation2 + $0x50] sm:$0xff]
        %v552 = vld [vmem:[#allocation2 + $0x58] sm:$0xff]
        %v553 = vld [vmem:[#allocation2 + $0x60] sm:$0xff]
        %v554 = vld [vmem:[#allocation2 + $0x68] sm:$0xff]
        %v555 = vld [vmem:[#allocation2 + $0x70] sm:$0xff]
        %v556 = vld [vmem:[#allocation2 + $0x78] sm:$0xff]
        %v557 = vld [vmem:[#allocation2 + $0x80] sm:$0xff]
        %v558 = vld [vmem:[#allocation2 + $0x88] sm:$0xff]
        %v559 = vld [vmem:[#allocation2 + $0x90] sm:$0xff]
        %v560 = vld [vmem:[#allocation2 + $0x98] sm:$0xff]
        %v561 = vld [vmem:[#allocation2 + $0xa0] sm:$0xff]
        %v562 = vld [vmem:[#allocation2 + $0xa8] sm:$0xff]
        %v563 = vld [vmem:[#allocation2 + $0xb0] sm:$0xff]
        %v564 = vld [vmem:[#allocation2 + $0xb8] sm:$0xff]
        %v565 = vld [vmem:[#allocation2 + $0xc0] sm:$0xff]
        %v566 = vld [vmem:[#allocation2 + $0xc8] sm:$0xff]
        %v567 = vld [vmem:[#allocation2 + $0xd0] sm:$0xff]
        %v568 = vld [vmem:[#allocation2 + $0xd8] sm:$0xff]
        %v569 = vld [vmem:[#allocation2 + $0xe0] sm:$0xff]
        %v570 = vld [vmem:[#allocation2 + $0xe8] sm:$0xff]
        %v571 = vld [vmem:[#allocation2 + $0xf0] sm:$0xff]
        %v572 = vld [vmem:[#allocation2 + $0xf8] sm:$0xff]
        %v573 = vld [vmem:[%s457] sm:$0xff]
        %v574 = vld [vmem:[%s457 + $0x8] sm:$0xff]
        %v575 = vld [vmem:[%s457 + $0x10] sm:$0xff]
        %v576 = vld [vmem:[%s457 + $0x18] sm:$0xf]
        %v577 = vld [vmem:[%s457 + $0x1c] sm:$0xff]
        %v578 = vld [vmem:[%s457 + $0x24] sm:$0xff]
        %v579 = vld [vmem:[%s457 + $0x2c] sm:$0xff]
        %v580 = vld [vmem:[%s457 + $0x34] sm:$0xf]
        %v581 = vld [vmem:[%s457 + $0x38] sm:$0xff]
        %v582 = vld [vmem:[%s457 + $0x40] sm:$0xff]
        %v583 = vld [vmem:[%s457 + $0x48] sm:$0xff]
        %v584 = vld [vmem:[%s457 + $0x50] sm:$0xf]
        %v585 = vld [vmem:[%s457 + $0x54] sm:$0xff]
        %v586 = vld [vmem:[%s457 + $0x5c] sm:$0xff]
        %v587 = vld [vmem:[%s457 + $0x64] sm:$0xff]
        %v588 = vld [vmem:[%s457 + $0x6c] sm:$0xf]
        %v589 = vld [vmem:[%s457 + $0x70] sm:$0xff]
        %v590 = vld [vmem:[%s457 + $0x78] sm:$0xff]
        %v591 = vld [vmem:[%s457 + $0x80] sm:$0xff]
        %v592 = vld [vmem:[%s457 + $0x88] sm:$0xf]
        %v593 = vld [vmem:[%s457 + $0x8c] sm:$0xff]
        %v594 = vld [vmem:[%s457 + $0x94] sm:$0xff]
        %v595 = vld [vmem:[%s457 + $0x9c] sm:$0xff]
        %v596 = vld [vmem:[%s457 + $0xa4] sm:$0xf]
        %v597 = vld [vmem:[%s457 + $0xa8] sm:$0xff]
        %v598 = vld [vmem:[%s457 + $0xb0] sm:$0xff]
        %v599 = vld [vmem:[%s457 + $0xb8] sm:$0xff]
        %v600 = vld [vmem:[%s457 + $0xc0] sm:$0xf]
        %v601 = vld [vmem:[%s457 + $0xc4] sm:$0xff]
        %v602 = vld [vmem:[%s457 + $0xcc] sm:$0xff]
        %v603 = vld [vmem:[%s457 + $0xd4] sm:$0xff]
        %v604 = vld [vmem:[%s457 + $0xdc] sm:$0xf]
        %v605 = vld [vmem:[%s457 + $0xe0] sm:$0xff]
        %v606 = vld [vmem:[%s457 + $0xe8] sm:$0xff]
        %v607 = vld [vmem:[%s457 + $0xf0] sm:$0xff]
        %v608 = vld [vmem:[%s457 + $0xf8] sm:$0xf]
        %v609 = vld [vmem:[%s457 + $0xfc] sm:$0xff]
        %v610 = vld [vmem:[%s457 + $0x104] sm:$0xff]
        %v611 = vld [vmem:[%s457 + $0x10c] sm:$0xff]
        %v612 = vld [vmem:[%s457 + $0x114] sm:$0xf]
        %v613 = vld [vmem:[%s457 + $0x118] sm:$0xff]
        %v614 = vld [vmem:[%s457 + $0x120] sm:$0xff]
        %v615 = vld [vmem:[%s457 + $0x128] sm:$0xff]
        %v616 = vld [vmem:[%s457 + $0x130] sm:$0xf]
        %v617 = vld [vmem:[%s457 + $0x134] sm:$0xff]
        %v618 = vld [vmem:[%s457 + $0x13c] sm:$0xff]
        %v619 = vld [vmem:[%s457 + $0x144] sm:$0xff]
        %v620 = vld [vmem:[%s457 + $0x14c] sm:$0xf]
        %v621 = vld [vmem:[%s457 + $0x150] sm:$0xff]
        %v622 = vld [vmem:[%s457 + $0x158] sm:$0xff]
        %v623 = vld [vmem:[%s457 + $0x160] sm:$0xff]
        %v624 = vld [vmem:[%s457 + $0x168] sm:$0xf]
        %v625 = vld [vmem:[%s457 + $0x16c] sm:$0xff]
        %v626 = vld [vmem:[%s457 + $0x174] sm:$0xff]
        %v627 = vld [vmem:[%s457 + $0x17c] sm:$0xff]
        %v628 = vld [vmem:[%s457 + $0x184] sm:$0xf]
        %v629 = vld [vmem:[%s457 + $0x188] sm:$0xff]
        %v630 = vld [vmem:[%s457 + $0x190] sm:$0xff]
        %v631 = vld [vmem:[%s457 + $0x198] sm:$0xff]
        %v632 = vld [vmem:[%s457 + $0x1a0] sm:$0xf]
        %v633 = vld [vmem:[%s457 + $0x1a4] sm:$0xff]
        %v634 = vld [vmem:[%s457 + $0x1ac] sm:$0xff]
        %v635 = vld [vmem:[%s457 + $0x1b4] sm:$0xff]
        %v636 = vld [vmem:[%s457 + $0x1bc] sm:$0xf]
        %v637 = vld [vmem:[%s457 + $0x1c0] sm:$0xff]
        %v638 = vld [vmem:[%s457 + $0x1c8] sm:$0xff]
        %v639 = vld [vmem:[%s457 + $0x1d0] sm:$0xff]
        %v640 = vld [vmem:[%s457 + $0x1d8] sm:$0xf]
        %v641 = vld [vmem:[%s457 + $0x1dc] sm:$0xff]
        %v642 = vld [vmem:[%s457 + $0x1e4] sm:$0xff]
        %v643 = vld [vmem:[%s457 + $0x1ec] sm:$0xff]
        %v644 = vld [vmem:[%s457 + $0x1f4] sm:$0xf]
        %v645 = vld [vmem:[%s457 + $0x1f8] sm:$0xff]
        %v646 = vld [vmem:[%s457 + $0x200] sm:$0xff]
        %v647 = vld [vmem:[%s457 + $0x208] sm:$0xff]
        %v648 = vld [vmem:[%s457 + $0x210] sm:$0xf]
        %v649 = vld [vmem:[%s457 + $0x214] sm:$0xff]
        %v650 = vld [vmem:[%s457 + $0x21c] sm:$0xff]
        %v651 = vld [vmem:[%s457 + $0x224] sm:$0xff]
        %v652 = vld [vmem:[%s457 + $0x22c] sm:$0xf]
        %v653 = vld [vmem:[%s457 + $0x230] sm:$0xff]
        %v654 = vld [vmem:[%s457 + $0x238] sm:$0xff]
        %v655 = vld [vmem:[%s457 + $0x240] sm:$0xff]
        %v656 = vld [vmem:[%s457 + $0x248] sm:$0xf]
        %v657 = vld [vmem:[%s457 + $0x24c] sm:$0xff]
        %v658 = vld [vmem:[%s457 + $0x254] sm:$0xff]
        %v659 = vld [vmem:[%s457 + $0x25c] sm:$0xff]
        %v660 = vld [vmem:[%s457 + $0x264] sm:$0xf]
        %v661 = vld [vmem:[%s457 + $0x268] sm:$0xff]
        %v662 = vld [vmem:[%s457 + $0x270] sm:$0xff]
        %v663 = vld [vmem:[%s457 + $0x278] sm:$0xff]
        %v664 = vld [vmem:[%s457 + $0x280] sm:$0xf]
        %v665 = vld [vmem:[%s457 + $0x284] sm:$0xff]
        %v666 = vld [vmem:[%s457 + $0x28c] sm:$0xff]
        %v667 = vld [vmem:[%s457 + $0x294] sm:$0xff]
        %v668 = vld [vmem:[%s457 + $0x29c] sm:$0xf]
        %v669 = vld [vmem:[%s457 + $0x2a0] sm:$0xff]
        %v670 = vld [vmem:[%s457 + $0x2a8] sm:$0xff]
        %v671 = vld [vmem:[%s457 + $0x2b0] sm:$0xff]
        %v672 = vld [vmem:[%s457 + $0x2b8] sm:$0xf]
        %v673 = vld [vmem:[%s457 + $0x2bc] sm:$0xff]
        %v674 = vld [vmem:[%s457 + $0x2c4] sm:$0xff]
        %v675 = vld [vmem:[%s457 + $0x2cc] sm:$0xff]
        %v676 = vld [vmem:[%s457 + $0x2d4] sm:$0xf]
        %v677 = vld [vmem:[%s457 + $0x2d8] sm:$0xff]
        %v678 = vld [vmem:[%s457 + $0x2e0] sm:$0xff]
        %v679 = vld [vmem:[%s457 + $0x2e8] sm:$0xff]
        %v680 = vld [vmem:[%s457 + $0x2f0] sm:$0xf]
        %v681 = vld [vmem:[%s457 + $0x2f4] sm:$0xff]
        %v682 = vld [vmem:[%s457 + $0x2fc] sm:$0xff]
        %v683 = vld [vmem:[%s457 + $0x304] sm:$0xff]
        %v684 = vld [vmem:[%s457 + $0x30c] sm:$0xf]
        %v685 = vld [vmem:[%s457 + $0x310] sm:$0xff]
        %v686 = vld [vmem:[%s457 + $0x318] sm:$0xff]
        %v687 = vld [vmem:[%s457 + $0x320] sm:$0xff]
        %v688 = vld [vmem:[%s457 + $0x328] sm:$0xf]
        %v689 = vld [vmem:[%s457 + $0x32c] sm:$0xff]
        %v690 = vld [vmem:[%s457 + $0x334] sm:$0xff]
        %v691 = vld [vmem:[%s457 + $0x33c] sm:$0xff]
        %v692 = vld [vmem:[%s457 + $0x344] sm:$0xf]
        %v693 = vld [vmem:[%s457 + $0x348] sm:$0xff]
        %v694 = vld [vmem:[%s457 + $0x350] sm:$0xff]
        %v695 = vld [vmem:[%s457 + $0x358] sm:$0xff]
        %v696 = vld [vmem:[%s457 + $0x360] sm:$0xf]
        %v697 = vld [vmem:[%s457 + $0x364] sm:$0xff]
        %v698 = vld [vmem:[%s457 + $0x36c] sm:$0xff]
        %v699 = vld [vmem:[%s457 + $0x374] sm:$0xff]
        %v700 = vld [vmem:[%s457 + $0x37c] sm:$0xf]
        %v701 = vld [vmem:[%s496] sm:$0xf]
        %v702 = vld [vmem:[%s496 + $0x4] sm:$0xf]
        %v703 = vld [vmem:[%s496 + $0x8] sm:$0xf]
        %v704 = vld [vmem:[%s496 + $0xc] sm:$0xf]
        %v705 = vld [vmem:[%s496 + $0x10] sm:$0xf]
        %v706 = vld [vmem:[%s496 + $0x14] sm:$0xf]
        %v707 = vld [vmem:[%s496 + $0x18] sm:$0xf]
        %v708 = vld [vmem:[%s496 + $0x1c] sm:$0xf]
        %v709 = vld [vmem:[%s496 + $0x20] sm:$0xf]
        %v710 = vld [vmem:[%s496 + $0x24] sm:$0xf]
        %v711 = vld [vmem:[%s496 + $0x28] sm:$0xf]
        %v712 = vld [vmem:[%s496 + $0x2c] sm:$0xf]
        %v713 = vld [vmem:[%s496 + $0x30] sm:$0xf]
        %v714 = vld [vmem:[%s496 + $0x34] sm:$0xf]
        %v715 = vld [vmem:[%s496 + $0x38] sm:$0xf]
        %v716 = vld [vmem:[%s496 + $0x3c] sm:$0xf]
        %v717 = vld [vmem:[%s496 + $0x40] sm:$0xf]
        %v718 = vld [vmem:[%s496 + $0x44] sm:$0xf]
        %v719 = vld [vmem:[%s496 + $0x48] sm:$0xf]
        %v720 = vld [vmem:[%s496 + $0x4c] sm:$0xf]
        %v721 = vld [vmem:[%s496 + $0x50] sm:$0xf]
        %v722 = vld [vmem:[%s496 + $0x54] sm:$0xf]
        %v723 = vld [vmem:[%s496 + $0x58] sm:$0xf]
        %v724 = vld [vmem:[%s496 + $0x5c] sm:$0xf]
        %v725 = vld [vmem:[%s496 + $0x60] sm:$0xf]
        %v726 = vld [vmem:[%s496 + $0x64] sm:$0xf]
        %v727 = vld [vmem:[%s496 + $0x68] sm:$0xf]
        %v728 = vld [vmem:[%s496 + $0x6c] sm:$0xf]
        %v729 = vld [vmem:[%s496 + $0x70] sm:$0xf]
        %v730 = vld [vmem:[%s496 + $0x74] sm:$0xf]
        %v731 = vld [vmem:[%s496 + $0x78] sm:$0xf]
        %v732 = vld [vmem:[%s496 + $0x7c] sm:$0xf]
        %v733 = vld [vmem:[%s496 + $0x80] sm:$0xf]
        %v734 = vld [vmem:[%s496 + $0x84] sm:$0xf]
        %v735 = vld [vmem:[%s496 + $0x88] sm:$0xf]
        %v736 = vld [vmem:[%s496 + $0x8c] sm:$0xf]
        %v737 = vld [vmem:[%s496 + $0x90] sm:$0xf]
        %v738 = vld [vmem:[%s496 + $0x94] sm:$0xf]
        %v739 = vld [vmem:[%s496 + $0x98] sm:$0xf]
        %v740 = vld [vmem:[%s496 + $0x9c] sm:$0xf]
        %v741 = vld [vmem:[%s496 + $0xa0] sm:$0xf]
        %v742 = vld [vmem:[%s496 + $0xa4] sm:$0xf]
        %v743 = vld [vmem:[%s496 + $0xa8] sm:$0xf]
        %v744 = vld [vmem:[%s496 + $0xac] sm:$0xf]
        %v745 = vld [vmem:[%s496 + $0xb0] sm:$0xf]
        %v746 = vld [vmem:[%s496 + $0xb4] sm:$0xf]
        %v747 = vld [vmem:[%s496 + $0xb8] sm:$0xf]
        %v748 = vld [vmem:[%s496 + $0xbc] sm:$0xf]
        %v749 = vld [vmem:[%s496 + $0xc0] sm:$0xf]
        %v750 = vld [vmem:[%s496 + $0xc4] sm:$0xf]
        %v751 = vld [vmem:[%s496 + $0xc8] sm:$0xf]
        %v752 = vld [vmem:[%s496 + $0xcc] sm:$0xf]
        %v753 = vld [vmem:[%s496 + $0xd0] sm:$0xf]
        %v754 = vld [vmem:[%s496 + $0xd4] sm:$0xf]
        %v755 = vld [vmem:[%s496 + $0xd8] sm:$0xf]
        %v756 = vld [vmem:[%s496 + $0xdc] sm:$0xf]
        %v757 = vld [vmem:[%s496 + $0xe0] sm:$0xf]
        %v758 = vld [vmem:[%s496 + $0xe4] sm:$0xf]
        %v759 = vld [vmem:[%s496 + $0xe8] sm:$0xf]
        %v760 = vld [vmem:[%s496 + $0xec] sm:$0xf]
        %v761 = vld [vmem:[%s496 + $0xf0] sm:$0xf]
        %v762 = vld [vmem:[%s496 + $0xf4] sm:$0xf]
        %v763 = vld [vmem:[%s496 + $0xf8] sm:$0xf]
        %v764 = vld [vmem:[%s496 + $0xfc] sm:$0xf]
        %v765 = vld [vmem:[%s496 + $0x100] sm:$0xf]
        %v766 = vld [vmem:[%s496 + $0x104] sm:$0xf]
        %v767 = vld [vmem:[%s496 + $0x108] sm:$0xf]
        %v768 = vld [vmem:[%s496 + $0x10c] sm:$0xf]
        %v769 = vld [vmem:[%s496 + $0x110] sm:$0xf]
        %v770 = vld [vmem:[%s496 + $0x114] sm:$0xf]
        %v771 = vld [vmem:[%s496 + $0x118] sm:$0xf]
        %v772 = vld [vmem:[%s496 + $0x11c] sm:$0xf]
        %v773 = vld [vmem:[%s496 + $0x120] sm:$0xf]
        %v774 = vld [vmem:[%s496 + $0x124] sm:$0xf]
        %v775 = vld [vmem:[%s496 + $0x128] sm:$0xf]
        %v776 = vld [vmem:[%s496 + $0x12c] sm:$0xf]
        %v777 = vld [vmem:[%s496 + $0x130] sm:$0xf]
        %v778 = vld [vmem:[%s496 + $0x134] sm:$0xf]
        %v779 = vld [vmem:[%s496 + $0x138] sm:$0xf]
        %v780 = vld [vmem:[%s496 + $0x13c] sm:$0xf]
        %v781 = vld [vmem:[%s496 + $0x140] sm:$0xf]
        %v782 = vld [vmem:[%s496 + $0x144] sm:$0xf]
        %v783 = vld [vmem:[%s496 + $0x148] sm:$0xf]
        %v784 = vld [vmem:[%s496 + $0x14c] sm:$0xf]
        %v785 = vld [vmem:[%s496 + $0x150] sm:$0xf]
        %v786 = vld [vmem:[%s496 + $0x154] sm:$0xf]
        %v787 = vld [vmem:[%s496 + $0x158] sm:$0xf]
        %v788 = vld [vmem:[%s496 + $0x15c] sm:$0xf]
        %v789 = vld [vmem:[%s496 + $0x160] sm:$0xf]
        %v790 = vld [vmem:[%s496 + $0x164] sm:$0xf]
        %v791 = vld [vmem:[%s496 + $0x168] sm:$0xf]
        %v792 = vld [vmem:[%s496 + $0x16c] sm:$0xf]
        %v793 = vld [vmem:[%s496 + $0x170] sm:$0xf]
        %v794 = vld [vmem:[%s496 + $0x174] sm:$0xf]
        %v795 = vld [vmem:[%s496 + $0x178] sm:$0xf]
        %v796 = vld [vmem:[%s496 + $0x17c] sm:$0xf]
        %v797 = vld [vmem:[%s496 + $0x180] sm:$0xf]
        %v798 = vld [vmem:[%s496 + $0x184] sm:$0xf]
        %v799 = vld [vmem:[%s496 + $0x188] sm:$0xf]
        %v800 = vld [vmem:[%s496 + $0x18c] sm:$0xf]
        %v801 = vld [vmem:[%s496 + $0x190] sm:$0xf]
        %v802 = vld [vmem:[%s496 + $0x194] sm:$0xf]
        %v803 = vld [vmem:[%s496 + $0x198] sm:$0xf]
        %v804 = vld [vmem:[%s496 + $0x19c] sm:$0xf]
        %v805 = vld [vmem:[%s496 + $0x1a0] sm:$0xf]
        %v806 = vld [vmem:[%s496 + $0x1a4] sm:$0xf]
        %v807 = vld [vmem:[%s496 + $0x1a8] sm:$0xf]
        %v808 = vld [vmem:[%s496 + $0x1ac] sm:$0xf]
        %v809 = vld [vmem:[%s496 + $0x1b0] sm:$0xf]
        %v810 = vld [vmem:[%s496 + $0x1b4] sm:$0xf]
        %v811 = vld [vmem:[%s496 + $0x1b8] sm:$0xf]
        %v812 = vld [vmem:[%s496 + $0x1bc] sm:$0xf]
        %v941 = vunpack.c.l.b16 %v573
        %v942 = vunpack.c.h.b16 %v573
        %v943 = vunpack.c.l.b16 %v574
        %v944 = vunpack.c.h.b16 %v574
        %v945 = vunpack.c.l.b16 %v575
        %v946 = vunpack.c.h.b16 %v575
        %v947 = vunpack.c.l.b16 %v576
        %v948 = vunpack.c.l.b16 %v577
        %v949 = vunpack.c.h.b16 %v577
        %v950 = vunpack.c.l.b16 %v578
        %v951 = vunpack.c.h.b16 %v578
        %v952 = vunpack.c.l.b16 %v579
        %v953 = vunpack.c.h.b16 %v579
        %v954 = vunpack.c.l.b16 %v580
        %v955 = vunpack.c.l.b16 %v581
        %v956 = vunpack.c.h.b16 %v581
        %v957 = vunpack.c.l.b16 %v582
        %v958 = vunpack.c.h.b16 %v582
        %v959 = vunpack.c.l.b16 %v583
        %v960 = vunpack.c.h.b16 %v583
        %v961 = vunpack.c.l.b16 %v584
        %v962 = vunpack.c.l.b16 %v585
        %v963 = vunpack.c.h.b16 %v585
        %v964 = vunpack.c.l.b16 %v586
        %v965 = vunpack.c.h.b16 %v586
        %v966 = vunpack.c.l.b16 %v587
        %v967 = vunpack.c.h.b16 %v587
        %v968 = vunpack.c.l.b16 %v588
        %v969 = vunpack.c.l.b16 %v589
        %v970 = vunpack.c.h.b16 %v589
        %v971 = vunpack.c.l.b16 %v590
        %v972 = vunpack.c.h.b16 %v590
        %v973 = vunpack.c.l.b16 %v591
        %v974 = vunpack.c.h.b16 %v591
        %v975 = vunpack.c.l.b16 %v592
        %v976 = vunpack.c.l.b16 %v593
        %v977 = vunpack.c.h.b16 %v593
        %v978 = vunpack.c.l.b16 %v594
        %v979 = vunpack.c.h.b16 %v594
        %v980 = vunpack.c.l.b16 %v595
        %v981 = vunpack.c.h.b16 %v595
        %v982 = vunpack.c.l.b16 %v596
        %v983 = vunpack.c.l.b16 %v597
        %v984 = vunpack.c.h.b16 %v597
        %v985 = vunpack.c.l.b16 %v598
        %v986 = vunpack.c.h.b16 %v598
        %v987 = vunpack.c.l.b16 %v599
        %v988 = vunpack.c.h.b16 %v599
        %v989 = vunpack.c.l.b16 %v600
        %v990 = vunpack.c.l.b16 %v601
        %v991 = vunpack.c.h.b16 %v601
        %v992 = vunpack.c.l.b16 %v602
        %v993 = vunpack.c.h.b16 %v602
        %v994 = vunpack.c.l.b16 %v603
        %v995 = vunpack.c.h.b16 %v603
        %v996 = vunpack.c.l.b16 %v604
        %v997 = vunpack.c.l.b16 %v605
        %v998 = vunpack.c.h.b16 %v605
        %v999 = vunpack.c.l.b16 %v606
        %v1000 = vunpack.c.h.b16 %v606
        %v1001 = vunpack.c.l.b16 %v607
        %v1002 = vunpack.c.h.b16 %v607
        %v1003 = vunpack.c.l.b16 %v608
        %v1004 = vunpack.c.l.b16 %v609
        %v1005 = vunpack.c.h.b16 %v609
        %v1006 = vunpack.c.l.b16 %v610
        %v1007 = vunpack.c.h.b16 %v610
        %v1008 = vunpack.c.l.b16 %v611
        %v1009 = vunpack.c.h.b16 %v611
        %v1010 = vunpack.c.l.b16 %v612
        %v1011 = vunpack.c.l.b16 %v613
        %v1012 = vunpack.c.h.b16 %v613
        %v1013 = vunpack.c.l.b16 %v614
        %v1014 = vunpack.c.h.b16 %v614
        %v1015 = vunpack.c.l.b16 %v615
        %v1016 = vunpack.c.h.b16 %v615
        %v1017 = vunpack.c.l.b16 %v616
        %v1018 = vunpack.c.l.b16 %v617
        %v1019 = vunpack.c.h.b16 %v617
        %v1020 = vunpack.c.l.b16 %v618
        %v1021 = vunpack.c.h.b16 %v618
        %v1022 = vunpack.c.l.b16 %v619
        %v1023 = vunpack.c.h.b16 %v619
        %v1024 = vunpack.c.l.b16 %v620
        %v1025 = vunpack.c.l.b16 %v621
        %v1026 = vunpack.c.h.b16 %v621
        %v1027 = vunpack.c.l.b16 %v622
        %v1028 = vunpack.c.h.b16 %v622
        %v1029 = vunpack.c.l.b16 %v623
        %v1030 = vunpack.c.h.b16 %v623
        %v1031 = vunpack.c.l.b16 %v624
        %v1032 = vunpack.c.l.b16 %v625
        %v1033 = vunpack.c.h.b16 %v625
        %v1034 = vunpack.c.l.b16 %v626
        %v1035 = vunpack.c.h.b16 %v626
        %v1036 = vunpack.c.l.b16 %v627
        %v1037 = vunpack.c.h.b16 %v627
        %v1038 = vunpack.c.l.b16 %v628
        %v1039 = vunpack.c.l.b16 %v629
        %v1040 = vunpack.c.h.b16 %v629
        %v1041 = vunpack.c.l.b16 %v630
        %v1042 = vunpack.c.h.b16 %v630
        %v1043 = vunpack.c.l.b16 %v631
        %v1044 = vunpack.c.h.b16 %v631
        %v1045 = vunpack.c.l.b16 %v632
        %v1046 = vunpack.c.l.b16 %v633
        %v1047 = vunpack.c.h.b16 %v633
        %v1048 = vunpack.c.l.b16 %v634
        %v1049 = vunpack.c.h.b16 %v634
        %v1050 = vunpack.c.l.b16 %v635
        %v1051 = vunpack.c.h.b16 %v635
        %v1052 = vunpack.c.l.b16 %v636
        %v1053 = vunpack.c.l.b16 %v637
        %v1054 = vunpack.c.h.b16 %v637
        %v1055 = vunpack.c.l.b16 %v638
        %v1056 = vunpack.c.h.b16 %v638
        %v1057 = vunpack.c.l.b16 %v639
        %v1058 = vunpack.c.h.b16 %v639
        %v1059 = vunpack.c.l.b16 %v640
        %v1060 = vunpack.c.l.b16 %v641
        %v1061 = vunpack.c.h.b16 %v641
        %v1062 = vunpack.c.l.b16 %v642
        %v1063 = vunpack.c.h.b16 %v642
        %v1064 = vunpack.c.l.b16 %v643
        %v1065 = vunpack.c.h.b16 %v643
        %v1066 = vunpack.c.l.b16 %v644
        %v1067 = vunpack.c.l.b16 %v645
        %v1068 = vunpack.c.h.b16 %v645
        %v1069 = vunpack.c.l.b16 %v646
        %v1070 = vunpack.c.h.b16 %v646
        %v1071 = vunpack.c.l.b16 %v647
        %v1072 = vunpack.c.h.b16 %v647
        %v1073 = vunpack.c.l.b16 %v648
        %v1074 = vunpack.c.l.b16 %v649
        %v1075 = vunpack.c.h.b16 %v649
        %v1076 = vunpack.c.l.b16 %v650
        %v1077 = vunpack.c.h.b16 %v650
        %v1078 = vunpack.c.l.b16 %v651
        %v1079 = vunpack.c.h.b16 %v651
        %v1080 = vunpack.c.l.b16 %v652
        %v1081 = vunpack.c.l.b16 %v653
        %v1082 = vunpack.c.h.b16 %v653
        %v1083 = vunpack.c.l.b16 %v654
        %v1084 = vunpack.c.h.b16 %v654
        %v1085 = vunpack.c.l.b16 %v655
        %v1086 = vunpack.c.h.b16 %v655
        %v1087 = vunpack.c.l.b16 %v656
        %v1088 = vunpack.c.l.b16 %v657
        %v1089 = vunpack.c.h.b16 %v657
        %v1090 = vunpack.c.l.b16 %v658
        %v1091 = vunpack.c.h.b16 %v658
        %v1092 = vunpack.c.l.b16 %v659
        %v1093 = vunpack.c.h.b16 %v659
        %v1094 = vunpack.c.l.b16 %v660
        %v1095 = vunpack.c.l.b16 %v661
        %v1096 = vunpack.c.h.b16 %v661
        %v1097 = vunpack.c.l.b16 %v662
        %v1098 = vunpack.c.h.b16 %v662
        %v1099 = vunpack.c.l.b16 %v663
        %v1100 = vunpack.c.h.b16 %v663
        %v1101 = vunpack.c.l.b16 %v664
        %v1102 = vunpack.c.l.b16 %v665
        %v1103 = vunpack.c.h.b16 %v665
        %v1104 = vunpack.c.l.b16 %v666
        %v1105 = vunpack.c.h.b16 %v666
        %v1106 = vunpack.c.l.b16 %v667
        %v1107 = vunpack.c.h.b16 %v667
        %v1108 = vunpack.c.l.b16 %v668
        %v1109 = vunpack.c.l.b16 %v669
        %v1110 = vunpack.c.h.b16 %v669
        %v1111 = vunpack.c.l.b16 %v670
        %v1112 = vunpack.c.h.b16 %v670
        %v1113 = vunpack.c.l.b16 %v671
        %v1114 = vunpack.c.h.b16 %v671
        %v1115 = vunpack.c.l.b16 %v672
        %v1116 = vunpack.c.l.b16 %v673
        %v1117 = vunpack.c.h.b16 %v673
        %v1118 = vunpack.c.l.b16 %v674
        %v1119 = vunpack.c.h.b16 %v674
        %v1120 = vunpack.c.l.b16 %v675
        %v1121 = vunpack.c.h.b16 %v675
        %v1122 = vunpack.c.l.b16 %v676
        %v1123 = vunpack.c.l.b16 %v677
        %v1124 = vunpack.c.h.b16 %v677
        %v1125 = vunpack.c.l.b16 %v678
        %v1126 = vunpack.c.h.b16 %v678
        %v1127 = vunpack.c.l.b16 %v679
        %v1128 = vunpack.c.h.b16 %v679
        %v1129 = vunpack.c.l.b16 %v680
        %v1130 = vunpack.c.l.b16 %v681
        %v1131 = vunpack.c.h.b16 %v681
        %v1132 = vunpack.c.l.b16 %v682
        %v1133 = vunpack.c.h.b16 %v682
        %v1134 = vunpack.c.l.b16 %v683
        %v1135 = vunpack.c.h.b16 %v683
        %v1136 = vunpack.c.l.b16 %v684
        %v1137 = vunpack.c.l.b16 %v685
        %v1138 = vunpack.c.h.b16 %v685
        %v1139 = vunpack.c.l.b16 %v686
        %v1140 = vunpack.c.h.b16 %v686
        %v1141 = vunpack.c.l.b16 %v687
        %v1142 = vunpack.c.h.b16 %v687
        %v1143 = vunpack.c.l.b16 %v688
        %v1144 = vunpack.c.l.b16 %v689
        %v1145 = vunpack.c.h.b16 %v689
        %v1146 = vunpack.c.l.b16 %v690
        %v1147 = vunpack.c.h.b16 %v690
        %v1148 = vunpack.c.l.b16 %v691
        %v1149 = vunpack.c.h.b16 %v691
        %v1150 = vunpack.c.l.b16 %v692
        %v1151 = vunpack.c.l.b16 %v693
        %v1152 = vunpack.c.h.b16 %v693
        %v1153 = vunpack.c.l.b16 %v694
        %v1154 = vunpack.c.h.b16 %v694
        %v1155 = vunpack.c.l.b16 %v695
        %v1156 = vunpack.c.h.b16 %v695
        %v1157 = vunpack.c.l.b16 %v696
        %v1158 = vunpack.c.l.b16 %v697
        %v1159 = vunpack.c.h.b16 %v697
        %v1160 = vunpack.c.l.b16 %v698
        %v1161 = vunpack.c.h.b16 %v698
        %v1162 = vunpack.c.l.b16 %v699
        %v1163 = vunpack.c.h.b16 %v699
        %v1164 = vunpack.c.l.b16 %v700
        %v1165 = vpack.c.b16 %v948, %v941
        %v1166 = vpack.c.b16 %v949, %v942
        %v1167 = vpack.c.b16 %v950, %v943
        %v1168 = vpack.c.b16 %v951, %v944
        %v1169 = vpack.c.b16 %v952, %v945
        %v1170 = vpack.c.b16 %v953, %v946
        %v1171 = vpack.c.b16 %v954, %v947
        %v1172 = vpack.c.b16 %v962, %v955
        %v1173 = vpack.c.b16 %v963, %v956
        %v1174 = vpack.c.b16 %v964, %v957
        %v1175 = vpack.c.b16 %v965, %v958
        %v1176 = vpack.c.b16 %v966, %v959
        %v1177 = vpack.c.b16 %v967, %v960
        %v1178 = vpack.c.b16 %v968, %v961
        %v1179 = vpack.c.b16 %v976, %v969
        %v1180 = vpack.c.b16 %v977, %v970
        %v1181 = vpack.c.b16 %v978, %v971
        %v1182 = vpack.c.b16 %v979, %v972
        %v1183 = vpack.c.b16 %v980, %v973
        %v1184 = vpack.c.b16 %v981, %v974
        %v1185 = vpack.c.b16 %v982, %v975
        %v1186 = vpack.c.b16 %v990, %v983
        %v1187 = vpack.c.b16 %v991, %v984
        %v1188 = vpack.c.b16 %v992, %v985
        %v1189 = vpack.c.b16 %v993, %v986
        %v1190 = vpack.c.b16 %v994, %v987
        %v1191 = vpack.c.b16 %v995, %v988
        %v1192 = vpack.c.b16 %v996, %v989
        %v1193 = vpack.c.b16 %v1004, %v997
        %v1194 = vpack.c.b16 %v1005, %v998
        %v1195 = vpack.c.b16 %v1006, %v999
        %v1196 = vpack.c.b16 %v1007, %v1000
        %v1197 = vpack.c.b16 %v1008, %v1001
        %v1198 = vpack.c.b16 %v1009, %v1002
        %v1199 = vpack.c.b16 %v1010, %v1003
        %v1200 = vpack.c.b16 %v1018, %v1011
        %v1201 = vpack.c.b16 %v1019, %v1012
        %v1202 = vpack.c.b16 %v1020, %v1013
        %v1203 = vpack.c.b16 %v1021, %v1014
        %v1204 = vpack.c.b16 %v1022, %v1015
        %v1205 = vpack.c.b16 %v1023, %v1016
        %v1206 = vpack.c.b16 %v1024, %v1017
        %v1207 = vpack.c.b16 %v1032, %v1025
        %v1208 = vpack.c.b16 %v1033, %v1026
        %v1209 = vpack.c.b16 %v1034, %v1027
        %v1210 = vpack.c.b16 %v1035, %v1028
        %v1211 = vpack.c.b16 %v1036, %v1029
        %v1212 = vpack.c.b16 %v1037, %v1030
        %v1213 = vpack.c.b16 %v1038, %v1031
        %v1214 = vpack.c.b16 %v1046, %v1039
        %v1215 = vpack.c.b16 %v1047, %v1040
        %v1216 = vpack.c.b16 %v1048, %v1041
        %v1217 = vpack.c.b16 %v1049, %v1042
        %v1218 = vpack.c.b16 %v1050, %v1043
        %v1219 = vpack.c.b16 %v1051, %v1044
        %v1220 = vpack.c.b16 %v1052, %v1045
        %v1221 = vpack.c.b16 %v1060, %v1053
        %v1222 = vpack.c.b16 %v1061, %v1054
        %v1223 = vpack.c.b16 %v1062, %v1055
        %v1224 = vpack.c.b16 %v1063, %v1056
        %v1225 = vpack.c.b16 %v1064, %v1057
        %v1226 = vpack.c.b16 %v1065, %v1058
        %v1227 = vpack.c.b16 %v1066, %v1059
        %v1228 = vpack.c.b16 %v1074, %v1067
        %v1229 = vpack.c.b16 %v1075, %v1068
        %v1230 = vpack.c.b16 %v1076, %v1069
        %v1231 = vpack.c.b16 %v1077, %v1070
        %v1232 = vpack.c.b16 %v1078, %v1071
        %v1233 = vpack.c.b16 %v1079, %v1072
        %v1234 = vpack.c.b16 %v1080, %v1073
        %v1235 = vpack.c.b16 %v1088, %v1081
        %v1236 = vpack.c.b16 %v1089, %v1082
        %v1237 = vpack.c.b16 %v1090, %v1083
        %v1238 = vpack.c.b16 %v1091, %v1084
        %v1239 = vpack.c.b16 %v1092, %v1085
        %v1240 = vpack.c.b16 %v1093, %v1086
        %v1241 = vpack.c.b16 %v1094, %v1087
        %v1242 = vpack.c.b16 %v1102, %v1095
        %v1243 = vpack.c.b16 %v1103, %v1096
        %v1244 = vpack.c.b16 %v1104, %v1097
        %v1245 = vpack.c.b16 %v1105, %v1098
        %v1246 = vpack.c.b16 %v1106, %v1099
        %v1247 = vpack.c.b16 %v1107, %v1100
        %v1248 = vpack.c.b16 %v1108, %v1101
        %v1249 = vpack.c.b16 %v1116, %v1109
        %v1250 = vpack.c.b16 %v1117, %v1110
        %v1251 = vpack.c.b16 %v1118, %v1111
        %v1252 = vpack.c.b16 %v1119, %v1112
        %v1253 = vpack.c.b16 %v1120, %v1113
        %v1254 = vpack.c.b16 %v1121, %v1114
        %v1255 = vpack.c.b16 %v1122, %v1115
        %v1256 = vpack.c.b16 %v1130, %v1123
        %v1257 = vpack.c.b16 %v1131, %v1124
        %v1258 = vpack.c.b16 %v1132, %v1125
        %v1259 = vpack.c.b16 %v1133, %v1126
        %v1260 = vpack.c.b16 %v1134, %v1127
        %v1261 = vpack.c.b16 %v1135, %v1128
        %v1262 = vpack.c.b16 %v1136, %v1129
        %v1263 = vpack.c.b16 %v1144, %v1137
        %v1264 = vpack.c.b16 %v1145, %v1138
        %v1265 = vpack.c.b16 %v1146, %v1139
        %v1266 = vpack.c.b16 %v1147, %v1140
        %v1267 = vpack.c.b16 %v1148, %v1141
        %v1268 = vpack.c.b16 %v1149, %v1142
        %v1269 = vpack.c.b16 %v1150, %v1143
        %v1270 = vpack.c.b16 %v1158, %v1151
        %v1271 = vpack.c.b16 %v1159, %v1152
        %v1272 = vpack.c.b16 %v1160, %v1153
        %v1273 = vpack.c.b16 %v1161, %v1154
        %v1274 = vpack.c.b16 %v1162, %v1155
        %v1275 = vpack.c.b16 %v1163, %v1156
        %v1276 = vpack.c.b16 %v1164, %v1157
        %v1501 = vunpack.c.l.b16 %v701
        %v1502 = vunpack.c.l.b16 %v702
        %v1503 = vunpack.c.l.b16 %v703
        %v1504 = vunpack.c.l.b16 %v704
        %v1505 = vunpack.c.l.b16 %v705
        %v1506 = vunpack.c.l.b16 %v706
        %v1507 = vunpack.c.l.b16 %v707
        %v1508 = vunpack.c.l.b16 %v708
        %v1509 = vunpack.c.l.b16 %v709
        %v1510 = vunpack.c.l.b16 %v710
        %v1511 = vunpack.c.l.b16 %v711
        %v1512 = vunpack.c.l.b16 %v712
        %v1513 = vunpack.c.l.b16 %v713
        %v1514 = vunpack.c.l.b16 %v714
        %v1515 = vunpack.c.l.b16 %v715
        %v1516 = vunpack.c.l.b16 %v716
        %v1517 = vunpack.c.l.b16 %v717
        %v1518 = vunpack.c.l.b16 %v718
        %v1519 = vunpack.c.l.b16 %v719
        %v1520 = vunpack.c.l.b16 %v720
        %v1521 = vunpack.c.l.b16 %v721
        %v1522 = vunpack.c.l.b16 %v722
        %v1523 = vunpack.c.l.b16 %v723
        %v1524 = vunpack.c.l.b16 %v724
        %v1525 = vunpack.c.l.b16 %v725
        %v1526 = vunpack.c.l.b16 %v726
        %v1527 = vunpack.c.l.b16 %v727
        %v1528 = vunpack.c.l.b16 %v728
        %v1529 = vunpack.c.l.b16 %v729
        %v1530 = vunpack.c.l.b16 %v730
        %v1531 = vunpack.c.l.b16 %v731
        %v1532 = vunpack.c.l.b16 %v732
        %v1533 = vunpack.c.l.b16 %v733
        %v1534 = vunpack.c.l.b16 %v734
        %v1535 = vunpack.c.l.b16 %v735
        %v1536 = vunpack.c.l.b16 %v736
        %v1537 = vunpack.c.l.b16 %v737
        %v1538 = vunpack.c.l.b16 %v738
        %v1539 = vunpack.c.l.b16 %v739
        %v1540 = vunpack.c.l.b16 %v740
        %v1541 = vunpack.c.l.b16 %v741
        %v1542 = vunpack.c.l.b16 %v742
        %v1543 = vunpack.c.l.b16 %v743
        %v1544 = vunpack.c.l.b16 %v744
        %v1545 = vunpack.c.l.b16 %v745
        %v1546 = vunpack.c.l.b16 %v746
        %v1547 = vunpack.c.l.b16 %v747
        %v1548 = vunpack.c.l.b16 %v748
        %v1549 = vunpack.c.l.b16 %v749
        %v1550 = vunpack.c.l.b16 %v750
        %v1551 = vunpack.c.l.b16 %v751
        %v1552 = vunpack.c.l.b16 %v752
        %v1553 = vunpack.c.l.b16 %v753
        %v1554 = vunpack.c.l.b16 %v754
        %v1555 = vunpack.c.l.b16 %v755
        %v1556 = vunpack.c.l.b16 %v756
        %v1557 = vunpack.c.l.b16 %v757
        %v1558 = vunpack.c.l.b16 %v758
        %v1559 = vunpack.c.l.b16 %v759
        %v1560 = vunpack.c.l.b16 %v760
        %v1561 = vunpack.c.l.b16 %v761
        %v1562 = vunpack.c.l.b16 %v762
        %v1563 = vunpack.c.l.b16 %v763
        %v1564 = vunpack.c.l.b16 %v764
        %v1565 = vunpack.c.l.b16 %v765
        %v1566 = vunpack.c.l.b16 %v766
        %v1567 = vunpack.c.l.b16 %v767
        %v1568 = vunpack.c.l.b16 %v768
        %v1569 = vunpack.c.l.b16 %v769
        %v1570 = vunpack.c.l.b16 %v770
        %v1571 = vunpack.c.l.b16 %v771
        %v1572 = vunpack.c.l.b16 %v772
        %v1573 = vunpack.c.l.b16 %v773
        %v1574 = vunpack.c.l.b16 %v774
        %v1575 = vunpack.c.l.b16 %v775
        %v1576 = vunpack.c.l.b16 %v776
        %v1577 = vunpack.c.l.b16 %v777
        %v1578 = vunpack.c.l.b16 %v778
        %v1579 = vunpack.c.l.b16 %v779
        %v1580 = vunpack.c.l.b16 %v780
        %v1581 = vunpack.c.l.b16 %v781
        %v1582 = vunpack.c.l.b16 %v782
        %v1583 = vunpack.c.l.b16 %v783
        %v1584 = vunpack.c.l.b16 %v784
        %v1585 = vunpack.c.l.b16 %v785
        %v1586 = vunpack.c.l.b16 %v786
        %v1587 = vunpack.c.l.b16 %v787
        %v1588 = vunpack.c.l.b16 %v788
        %v1589 = vunpack.c.l.b16 %v789
        %v1590 = vunpack.c.l.b16 %v790
        %v1591 = vunpack.c.l.b16 %v791
        %v1592 = vunpack.c.l.b16 %v792
        %v1593 = vunpack.c.l.b16 %v793
        %v1594 = vunpack.c.l.b16 %v794
        %v1595 = vunpack.c.l.b16 %v795
        %v1596 = vunpack.c.l.b16 %v796
        %v1597 = vunpack.c.l.b16 %v797
        %v1598 = vunpack.c.l.b16 %v798
        %v1599 = vunpack.c.l.b16 %v799
        %v1600 = vunpack.c.l.b16 %v800
        %v1601 = vunpack.c.l.b16 %v801
        %v1602 = vunpack.c.l.b16 %v802
        %v1603 = vunpack.c.l.b16 %v803
        %v1604 = vunpack.c.l.b16 %v804
        %v1605 = vunpack.c.l.b16 %v805
        %v1606 = vunpack.c.l.b16 %v806
        %v1607 = vunpack.c.l.b16 %v807
        %v1608 = vunpack.c.l.b16 %v808
        %v1609 = vunpack.c.l.b16 %v809
        %v1610 = vunpack.c.l.b16 %v810
        %v1611 = vunpack.c.l.b16 %v811
        %v1612 = vunpack.c.l.b16 %v812
        %v1613 = vpack.c.b16 %v1502, %v1501
        %v1614 = vpack.c.b16 %v1504, %v1503
        %v1615 = vpack.c.b16 %v1506, %v1505
        %v1616 = vpack.c.b16 %v1508, %v1507
        %v1617 = vpack.c.b16 %v1510, %v1509
        %v1618 = vpack.c.b16 %v1512, %v1511
        %v1619 = vpack.c.b16 %v1514, %v1513
        %v1620 = vpack.c.b16 %v1516, %v1515
        %v1621 = vpack.c.b16 %v1518, %v1517
        %v1622 = vpack.c.b16 %v1520, %v1519
        %v1623 = vpack.c.b16 %v1522, %v1521
        %v1624 = vpack.c.b16 %v1524, %v1523
        %v1625 = vpack.c.b16 %v1526, %v1525
        %v1626 = vpack.c.b16 %v1528, %v1527
        %v1627 = vpack.c.b16 %v1530, %v1529
        %v1628 = vpack.c.b16 %v1532, %v1531
        %v1629 = vpack.c.b16 %v1534, %v1533
        %v1630 = vpack.c.b16 %v1536, %v1535
        %v1631 = vpack.c.b16 %v1538, %v1537
        %v1632 = vpack.c.b16 %v1540, %v1539
        %v1633 = vpack.c.b16 %v1542, %v1541
        %v1634 = vpack.c.b16 %v1544, %v1543
        %v1635 = vpack.c.b16 %v1546, %v1545
        %v1636 = vpack.c.b16 %v1548, %v1547
        %v1637 = vpack.c.b16 %v1550, %v1549
        %v1638 = vpack.c.b16 %v1552, %v1551
        %v1639 = vpack.c.b16 %v1554, %v1553
        %v1640 = vpack.c.b16 %v1556, %v1555
        %v1641 = vpack.c.b16 %v1558, %v1557
        %v1642 = vpack.c.b16 %v1560, %v1559
        %v1643 = vpack.c.b16 %v1562, %v1561
        %v1644 = vpack.c.b16 %v1564, %v1563
        %v1645 = vpack.c.b16 %v1566, %v1565
        %v1646 = vpack.c.b16 %v1568, %v1567
        %v1647 = vpack.c.b16 %v1570, %v1569
        %v1648 = vpack.c.b16 %v1572, %v1571
        %v1649 = vpack.c.b16 %v1574, %v1573
        %v1650 = vpack.c.b16 %v1576, %v1575
        %v1651 = vpack.c.b16 %v1578, %v1577
        %v1652 = vpack.c.b16 %v1580, %v1579
        %v1653 = vpack.c.b16 %v1582, %v1581
        %v1654 = vpack.c.b16 %v1584, %v1583
        %v1655 = vpack.c.b16 %v1586, %v1585
        %v1656 = vpack.c.b16 %v1588, %v1587
        %v1657 = vpack.c.b16 %v1590, %v1589
        %v1658 = vpack.c.b16 %v1592, %v1591
        %v1659 = vpack.c.b16 %v1594, %v1593
        %v1660 = vpack.c.b16 %v1596, %v1595
        %v1661 = vpack.c.b16 %v1598, %v1597
        %v1662 = vpack.c.b16 %v1600, %v1599
        %v1663 = vpack.c.b16 %v1602, %v1601
        %v1664 = vpack.c.b16 %v1604, %v1603
        %v1665 = vpack.c.b16 %v1606, %v1605
        %v1666 = vpack.c.b16 %v1608, %v1607
        %v1667 = vpack.c.b16 %v1610, %v1609
        %v1668 = vpack.c.b16 %v1612, %v1611
        %1725 = vmatprep.subr.bf16.mxu0 0
        %1726 = vmatpush1.bf16.msra.mxu0 %v1613
        %1727 = vmatprep.subr.bf16.mxu0 0
        %1728 = vmatpush1.bf16.msra.mxu0 %v1614
        %1729 = vmatprep.subr.bf16.mxu0 0
        %1730 = vmatpush1.bf16.msra.mxu0 %v1615
        %1731 = vmatprep.subr.bf16.mxu0 0
        %1732 = vmatpush1.bf16.msra.mxu0 %v1616
        %1733 = vmatprep.subr.bf16.mxu0 0
        %1734 = vmatpush1.bf16.msra.mxu0 %v1617
        %1735 = vmatprep.subr.bf16.mxu0 0
        %1736 = vmatpush1.bf16.msra.mxu0 %v1618
        %1737 = vmatprep.subr.bf16.mxu0 0
        %1738 = vmatpush1.bf16.msra.mxu0 %v1619
        %1739 = vmatprep.subr.bf16.mxu0 0
        %1740 = vmatpush1.bf16.msra.mxu0 %v1620
        %1741 = vmatprep.subr.bf16.mxu0 0
        %1742 = vmatpush1.bf16.msra.mxu0 %v1621
        %1743 = vmatprep.subr.bf16.mxu0 0
        %1744 = vmatpush1.bf16.msra.mxu0 %v1622
        %1745 = vmatprep.subr.bf16.mxu0 0
        %1746 = vmatpush1.bf16.msra.mxu0 %v1623
        %1747 = vmatprep.subr.bf16.mxu0 0
        %1748 = vmatpush1.bf16.msra.mxu0 %v1624
        %1749 = vmatprep.subr.bf16.mxu0 0
        %1750 = vmatpush1.bf16.msra.mxu0 %v1625
        %1751 = vmatprep.subr.bf16.mxu0 0
        %1752 = vmatpush1.bf16.msra.mxu0 %v1626
        %1753 = vmatprep.subr.bf16.mxu0 0
        %1754 = vmatpush1.bf16.msra.mxu0 %v1627
        %1755 = vmatprep.subr.bf16.mxu0 0
        %1756 = vmatpush1.bf16.msra.mxu0 %v1628
        %1757 = vmatprep.mubr.bf16.mxu0 %v1166
        %1758 = vmatmul.mubr.bf16.gmra.mrb[0].mxu0 %v1165
        %v1759 = vpop.f32.mrb[0].mxu0
        %v1760 = vadd.f32 0.0, %v1759
        %v1761 = vpop.f32.mrb[0].mxu0
        %v1762 = vpop.f32.mrb[0].mxu0
        %v1763 = vadd.f32 0.0, %v1762
        %v1764 = vpop.f32.mrb[0].mxu0
        %1765 = vmatprep.mubr.bf16.mxu0 %v1173
        %1766 = vmatmul.mubr.bf16.gmra.mrb[0].mxu0 %v1172
        %v1767 = vpop.f32.mrb[0].mxu0
        %v1768 = vadd.f32 0.0, %v1767
        %v1769 = vpop.f32.mrb[0].mxu0
        %v1770 = vpop.f32.mrb[0].mxu0
        %v1771 = vadd.f32 0.0, %v1770
        %v1772 = vpop.f32.mrb[0].mxu0
        %1773 = vmatprep.mubr.bf16.mxu0 %v1180
        %1774 = vmatmul.mubr.bf16.gmra.mrb[0].mxu0 %v1179
        %v1775 = vpop.f32.mrb[0].mxu0
        %v1776 = vadd.f32 0.0, %v1775
        %v1777 = vpop.f32.mrb[0].mxu0
        %v1778 = vpop.f32.mrb[0].mxu0
        %v1779 = vadd.f32 0.0, %v1778
        %v1780 = vpop.f32.mrb[0].mxu0
        %1781 = vmatprep.mubr.bf16.mxu0 %v1187
        %1782 = vmatmul.mubr.bf16.gmra.mrb[0].mxu0 %v1186
        %v1783 = vpop.f32.mrb[0].mxu0
        %v1784 = vadd.f32 0.0, %v1783
        %v1785 = vpop.f32.mrb[0].mxu0
        %v1786 = vpop.f32.mrb[0].mxu0
        %v1787 = vadd.f32 0.0, %v1786
        %v1788 = vpop.f32.mrb[0].mxu0
        %1789 = vmatprep.mubr.bf16.mxu0 %v1194
        %1790 = vmatmul.mubr.bf16.gmra.mrb[0].mxu0 %v1193
        %v1791 = vpop.f32.mrb[0].mxu0
        %v1792 = vadd.f32 0.0, %v1791
        %v1793 = vpop.f32.mrb[0].mxu0
        %v1794 = vpop.f32.mrb[0].mxu0
        %v1795 = vadd.f32 0.0, %v1794
        %v1796 = vpop.f32.mrb[0].mxu0
        %1797 = vmatprep.mubr.bf16.mxu0 %v1201
        %1798 = vmatmul.mubr.bf16.gmra.mrb[0].mxu0 %v1200
        %v1799 = vpop.f32.mrb[0].mxu0
        %v1800 = vadd.f32 0.0, %v1799
        %v1801 = vpop.f32.mrb[0].mxu0
        %v1802 = vpop.f32.mrb[0].mxu0
        %v1803 = vadd.f32 0.0, %v1802
        %v1804 = vpop.f32.mrb[0].mxu0
        %1805 = vmatprep.mubr.bf16.mxu0 %v1208
        %1806 = vmatmul.mubr.bf16.gmra.mrb[0].mxu0 %v1207
        %v1807 = vpop.f32.mrb[0].mxu0
        %v1808 = vadd.f32 0.0, %v1807
        %v1809 = vpop.f32.mrb[0].mxu0
        %v1810 = vpop.f32.mrb[0].mxu0
        %v1811 = vadd.f32 0.0, %v1810
        %v1812 = vpop.f32.mrb[0].mxu0
        %1813 = vmatprep.mubr.bf16.mxu0 %v1215
        %1814 = vmatmul.mubr.bf16.gmra.mrb[0].mxu0 %v1214
        %v1815 = vpop.f32.mrb[0].mxu0
        %v1816 = vadd.f32 0.0, %v1815
        %v1817 = vpop.f32.mrb[0].mxu0
        %v1818 = vpop.f32.mrb[0].mxu0
        %v1819 = vadd.f32 0.0, %v1818
        %v1820 = vpop.f32.mrb[0].mxu0
        %1821 = vmatprep.mubr.bf16.mxu0 %v1222
        %1822 = vmatmul.mubr.bf16.gmra.mrb[0].mxu0 %v1221
        %v1823 = vpop.f32.mrb[0].mxu0
        %v1824 = vadd.f32 0.0, %v1823
        %v1825 = vpop.f32.mrb[0].mxu0
        %v1826 = vpop.f32.mrb[0].mxu0
        %v1827 = vadd.f32 0.0, %v1826
        %v1828 = vpop.f32.mrb[0].mxu0
        %1829 = vmatprep.mubr.bf16.mxu0 %v1229
        %1830 = vmatmul.mubr.bf16.gmra.mrb[0].mxu0 %v1228
        %v1831 = vpop.f32.mrb[0].mxu0
        %v1832 = vadd.f32 0.0, %v1831
        %v1833 = vpop.f32.mrb[0].mxu0
        %v1834 = vpop.f32.mrb[0].mxu0
        %v1835 = vadd.f32 0.0, %v1834
        %v1836 = vpop.f32.mrb[0].mxu0
        %1837 = vmatprep.mubr.bf16.mxu0 %v1236
        %1838 = vmatmul.mubr.bf16.gmra.mrb[0].mxu0 %v1235
        %v1839 = vpop.f32.mrb[0].mxu0
        %v1840 = vadd.f32 0.0, %v1839
        %v1841 = vpop.f32.mrb[0].mxu0
        %v1842 = vpop.f32.mrb[0].mxu0
        %v1843 = vadd.f32 0.0, %v1842
        %v1844 = vpop.f32.mrb[0].mxu0
        %1845 = vmatprep.mubr.bf16.mxu0 %v1243
        %1846 = vmatmul.mubr.bf16.gmra.mrb[0].mxu0 %v1242
        %v1847 = vpop.f32.mrb[0].mxu0
        %v1848 = vadd.f32 0.0, %v1847
        %v1849 = vpop.f32.mrb[0].mxu0
        %v1850 = vpop.f32.mrb[0].mxu0
        %v1851 = vadd.f32 0.0, %v1850
        %v1852 = vpop.f32.mrb[0].mxu0
        %1853 = vmatprep.mubr.bf16.mxu0 %v1250
        %1854 = vmatmul.mubr.bf16.gmra.mrb[0].mxu0 %v1249
        %v1855 = vpop.f32.mrb[0].mxu0
        %v1856 = vadd.f32 0.0, %v1855
        %v1857 = vpop.f32.mrb[0].mxu0
        %v1858 = vpop.f32.mrb[0].mxu0
        %v1859 = vadd.f32 0.0, %v1858
        %v1860 = vpop.f32.mrb[0].mxu0
        %1861 = vmatprep.mubr.bf16.mxu0 %v1257
        %1862 = vmatmul.mubr.bf16.gmra.mrb[0].mxu0 %v1256
        %v1863 = vpop.f32.mrb[0].mxu0
        %v1864 = vadd.f32 0.0, %v1863
        %v1865 = vpop.f32.mrb[0].mxu0
        %v1866 = vpop.f32.mrb[0].mxu0
        %v1867 = vadd.f32 0.0, %v1866
        %v1868 = vpop.f32.mrb[0].mxu0
        %1869 = vmatprep.mubr.bf16.mxu0 %v1264
        %1870 = vmatmul.mubr.bf16.gmra.mrb[0].mxu0 %v1263
        %v1871 = vpop.f32.mrb[0].mxu0
        %v1872 = vadd.f32 0.0, %v1871
        %v1873 = vpop.f32.mrb[0].mxu0
        %v1874 = vpop.f32.mrb[0].mxu0
        %v1875 = vadd.f32 0.0, %v1874
        %v1876 = vpop.f32.mrb[0].mxu0
        %1877 = vmatprep.mubr.bf16.mxu0 %v1271
        %1878 = vmatmul.mubr.bf16.gmra.mrb[0].mxu0 %v1270
        %v1879 = vpop.f32.mrb[0].mxu0
        %v1880 = vadd.f32 0.0, %v1879
        %v1881 = vpop.f32.mrb[0].mxu0
        %v1882 = vpop.f32.mrb[0].mxu0
        %v1883 = vadd.f32 0.0, %v1882
        %v1884 = vpop.f32.mrb[0].mxu0
        %1885 = vdwg.mxu0
        %1886 = vmatprep.subr.bf16.mxu0 0
        %1887 = vmatpush1.bf16.msra.mxu0 %v1629
        %1888 = vmatprep.subr.bf16.mxu0 0
        %1889 = vmatpush1.bf16.msra.mxu0 %v1630
        %1890 = vmatprep.subr.bf16.mxu0 0
        %1891 = vmatpush1.bf16.msra.mxu0 %v1631
        %1892 = vmatprep.subr.bf16.mxu0 0
        %1893 = vmatpush1.bf16.msra.mxu0 %v1632
        %1894 = vmatprep.subr.bf16.mxu0 0
        %1895 = vmatpush1.bf16.msra.mxu0 %v1633
        %1896 = vmatprep.subr.bf16.mxu0 0
        %1897 = vmatpush1.bf16.msra.mxu0 %v1634
        %1898 = vmatprep.subr.bf16.mxu0 0
        %1899 = vmatpush1.bf16.msra.mxu0 %v1635
        %1900 = vmatprep.subr.bf16.mxu0 0
        %1901 = vmatpush1.bf16.msra.mxu0 %v1636
        %1902 = vmatprep.subr.bf16.mxu0 0
        %1903 = vmatpush1.bf16.msra.mxu0 %v1637
        %1904 = vmatprep.subr.bf16.mxu0 0
        %1905 = vmatpush1.bf16.msra.mxu0 %v1638
        %1906 = vmatprep.subr.bf16.mxu0 0
        %1907 = vmatpush1.bf16.msra.mxu0 %v1639
        %1908 = vmatprep.subr.bf16.mxu0 0
        %1909 = vmatpush1.bf16.msra.mxu0 %v1640
        %1910 = vmatprep.subr.bf16.mxu0 0
        %1911 = vmatpush1.bf16.msra.mxu0 %v1641
        %1912 = vmatprep.subr.bf16.mxu0 0
        %1913 = vmatpush1.bf16.msra.mxu0 %v1642
        %1914 = vmatprep.subr.bf16.mxu0 0
        %1915 = vmatpush1.bf16.msra.mxu0 %v1643
        %1916 = vmatprep.subr.bf16.mxu0 0
        %1917 = vmatpush1.bf16.msra.mxu0 %v1644
        %1918 = vmatprep.mubr.bf16.mxu0 %v1168
        %1919 = vmatmul.mubr.bf16.gmra.mrb[0].mxu0 %v1167
        %v1920 = vpop.f32.mrb[0].mxu0
        %v1921 = vadd.f32 %v1760, %v1920
        %v1922 = vpop.f32.mrb[0].mxu0
        %v1923 = vpop.f32.mrb[0].mxu0
        %v1924 = vadd.f32 %v1763, %v1923
        %v1925 = vpop.f32.mrb[0].mxu0
        %1926 = vmatprep.mubr.bf16.mxu0 %v1175
        %1927 = vmatmul.mubr.bf16.gmra.mrb[0].mxu0 %v1174
        %v1928 = vpop.f32.mrb[0].mxu0
        %v1929 = vadd.f32 %v1768, %v1928
        %v1930 = vpop.f32.mrb[0].mxu0
        %v1931 = vpop.f32.mrb[0].mxu0
        %v1932 = vadd.f32 %v1771, %v1931
        %v1933 = vpop.f32.mrb[0].mxu0
        %1934 = vmatprep.mubr.bf16.mxu0 %v1182
        %1935 = vmatmul.mubr.bf16.gmra.mrb[0].mxu0 %v1181
        %v1936 = vpop.f32.mrb[0].mxu0
        %v1937 = vadd.f32 %v1776, %v1936
        %v1938 = vpop.f32.mrb[0].mxu0
        %v1939 = vpop.f32.mrb[0].mxu0
        %v1940 = vadd.f32 %v1779, %v1939
        %v1941 = vpop.f32.mrb[0].mxu0
        %1942 = vmatprep.mubr.bf16.mxu0 %v1189
        %1943 = vmatmul.mubr.bf16.gmra.mrb[0].mxu0 %v1188
        %v1944 = vpop.f32.mrb[0].mxu0
        %v1945 = vadd.f32 %v1784, %v1944
        %v1946 = vpop.f32.mrb[0].mxu0
        %v1947 = vpop.f32.mrb[0].mxu0
        %v1948 = vadd.f32 %v1787, %v1947
        %v1949 = vpop.f32.mrb[0].mxu0
        %1950 = vmatprep.mubr.bf16.mxu0 %v1196
        %1951 = vmatmul.mubr.bf16.gmra.mrb[0].mxu0 %v1195
        %v1952 = vpop.f32.mrb[0].mxu0
        %v1953 = vadd.f32 %v1792, %v1952
        %v1954 = vpop.f32.mrb[0].mxu0
        %v1955 = vpop.f32.mrb[0].mxu0
        %v1956 = vadd.f32 %v1795, %v1955
        %v1957 = vpop.f32.mrb[0].mxu0
        %1958 = vmatprep.mubr.bf16.mxu0 %v1203
        %1959 = vmatmul.mubr.bf16.gmra.mrb[0].mxu0 %v1202
        %v1960 = vpop.f32.mrb[0].mxu0
        %v1961 = vadd.f32 %v1800, %v1960
        %v1962 = vpop.f32.mrb[0].mxu0
        %v1963 = vpop.f32.mrb[0].mxu0
        %v1964 = vadd.f32 %v1803, %v1963
        %v1965 = vpop.f32.mrb[0].mxu0
        %1966 = vmatprep.mubr.bf16.mxu0 %v1210
        %1967 = vmatmul.mubr.bf16.gmra.mrb[0].mxu0 %v1209
        %v1968 = vpop.f32.mrb[0].mxu0
        %v1969 = vadd.f32 %v1808, %v1968
        %v1970 = vpop.f32.mrb[0].mxu0
        %v1971 = vpop.f32.mrb[0].mxu0
        %v1972 = vadd.f32 %v1811, %v1971
        %v1973 = vpop.f32.mrb[0].mxu0
        %1974 = vmatprep.mubr.bf16.mxu0 %v1217
        %1975 = vmatmul.mubr.bf16.gmra.mrb[0].mxu0 %v1216
        %v1976 = vpop.f32.mrb[0].mxu0
        %v1977 = vadd.f32 %v1816, %v1976
        %v1978 = vpop.f32.mrb[0].mxu0
        %v1979 = vpop.f32.mrb[0].mxu0
        %v1980 = vadd.f32 %v1819, %v1979
        %v1981 = vpop.f32.mrb[0].mxu0
        %1982 = vmatprep.mubr.bf16.mxu0 %v1224
        %1983 = vmatmul.mubr.bf16.gmra.mrb[0].mxu0 %v1223
        %v1984 = vpop.f32.mrb[0].mxu0
        %v1985 = vadd.f32 %v1824, %v1984
        %v1986 = vpop.f32.mrb[0].mxu0
        %v1987 = vpop.f32.mrb[0].mxu0
        %v1988 = vadd.f32 %v1827, %v1987
        %v1989 = vpop.f32.mrb[0].mxu0
        %1990 = vmatprep.mubr.bf16.mxu0 %v1231
        %1991 = vmatmul.mubr.bf16.gmra.mrb[0].mxu0 %v1230
        %v1992 = vpop.f32.mrb[0].mxu0
        %v1993 = vadd.f32 %v1832, %v1992
        %v1994 = vpop.f32.mrb[0].mxu0
        %v1995 = vpop.f32.mrb[0].mxu0
        %v1996 = vadd.f32 %v1835, %v1995
        %v1997 = vpop.f32.mrb[0].mxu0
        %1998 = vmatprep.mubr.bf16.mxu0 %v1238
        %1999 = vmatmul.mubr.bf16.gmra.mrb[0].mxu0 %v1237
        %v2000 = vpop.f32.mrb[0].mxu0
        %v2001 = vadd.f32 %v1840, %v2000
        %v2002 = vpop.f32.mrb[0].mxu0
        %v2003 = vpop.f32.mrb[0].mxu0
        %v2004 = vadd.f32 %v1843, %v2003
        %v2005 = vpop.f32.mrb[0].mxu0
        %2006 = vmatprep.mubr.bf16.mxu0 %v1245
        %2007 = vmatmul.mubr.bf16.gmra.mrb[0].mxu0 %v1244
        %v2008 = vpop.f32.mrb[0].mxu0
        %v2009 = vadd.f32 %v1848, %v2008
        %v2010 = vpop.f32.mrb[0].mxu0
        %v2011 = vpop.f32.mrb[0].mxu0
        %v2012 = vadd.f32 %v1851, %v2011
        %v2013 = vpop.f32.mrb[0].mxu0
        %2014 = vmatprep.mubr.bf16.mxu0 %v1252
        %2015 = vmatmul.mubr.bf16.gmra.mrb[0].mxu0 %v1251
        %v2016 = vpop.f32.mrb[0].mxu0
        %v2017 = vadd.f32 %v1856, %v2016
        %v2018 = vpop.f32.mrb[0].mxu0
        %v2019 = vpop.f32.mrb[0].mxu0
        %v2020 = vadd.f32 %v1859, %v2019
        %v2021 = vpop.f32.mrb[0].mxu0
        %2022 = vmatprep.mubr.bf16.mxu0 %v1259
        %2023 = vmatmul.mubr.bf16.gmra.mrb[0].mxu0 %v1258
        %v2024 = vpop.f32.mrb[0].mxu0
        %v2025 = vadd.f32 %v1864, %v2024
        %v2026 = vpop.f32.mrb[0].mxu0
        %v2027 = vpop.f32.mrb[0].mxu0
        %v2028 = vadd.f32 %v1867, %v2027
        %v2029 = vpop.f32.mrb[0].mxu0
        %2030 = vmatprep.mubr.bf16.mxu0 %v1266
        %2031 = vmatmul.mubr.bf16.gmra.mrb[0].mxu0 %v1265
        %v2032 = vpop.f32.mrb[0].mxu0
        %v2033 = vadd.f32 %v1872, %v2032
        %v2034 = vpop.f32.mrb[0].mxu0
        %v2035 = vpop.f32.mrb[0].mxu0
        %v2036 = vadd.f32 %v1875, %v2035
        %v2037 = vpop.f32.mrb[0].mxu0
        %2038 = vmatprep.mubr.bf16.mxu0 %v1273
        %2039 = vmatmul.mubr.bf16.gmra.mrb[0].mxu0 %v1272
        %v2040 = vpop.f32.mrb[0].mxu0
        %v2041 = vadd.f32 %v1880, %v2040
        %v2042 = vpop.f32.mrb[0].mxu0
        %v2043 = vpop.f32.mrb[0].mxu0
        %v2044 = vadd.f32 %v1883, %v2043
        %v2045 = vpop.f32.mrb[0].mxu0
        %2046 = vdwg.mxu0
        %2047 = vmatprep.subr.bf16.mxu0 0
        %2048 = vmatpush1.bf16.msra.mxu0 %v1645
        %2049 = vmatprep.subr.bf16.mxu0 0
        %2050 = vmatpush1.bf16.msra.mxu0 %v1646
        %2051 = vmatprep.subr.bf16.mxu0 0
        %2052 = vmatpush1.bf16.msra.mxu0 %v1647
        %2053 = vmatprep.subr.bf16.mxu0 0
        %2054 = vmatpush1.bf16.msra.mxu0 %v1648
        %2055 = vmatprep.subr.bf16.mxu0 0
        %2056 = vmatpush1.bf16.msra.mxu0 %v1649
        %2057 = vmatprep.subr.bf16.mxu0 0
        %2058 = vmatpush1.bf16.msra.mxu0 %v1650
        %2059 = vmatprep.subr.bf16.mxu0 0
        %2060 = vmatpush1.bf16.msra.mxu0 %v1651
        %2061 = vmatprep.subr.bf16.mxu0 0
        %2062 = vmatpush1.bf16.msra.mxu0 %v1652
        %2063 = vmatprep.subr.bf16.mxu0 0
        %2064 = vmatpush1.bf16.msra.mxu0 %v1653
        %2065 = vmatprep.subr.bf16.mxu0 0
        %2066 = vmatpush1.bf16.msra.mxu0 %v1654
        %2067 = vmatprep.subr.bf16.mxu0 0
        %2068 = vmatpush1.bf16.msra.mxu0 %v1655
        %2069 = vmatprep.subr.bf16.mxu0 0
        %2070 = vmatpush1.bf16.msra.mxu0 %v1656
        %2071 = vmatprep.subr.bf16.mxu0 0
        %2072 = vmatpush1.bf16.msra.mxu0 %v1657
        %2073 = vmatprep.subr.bf16.mxu0 0
        %2074 = vmatpush1.bf16.msra.mxu0 %v1658
        %2075 = vmatprep.subr.bf16.mxu0 0
        %2076 = vmatpush1.bf16.msra.mxu0 %v1659
        %2077 = vmatprep.subr.bf16.mxu0 0
        %2078 = vmatpush1.bf16.msra.mxu0 %v1660
        %2079 = vmatprep.mubr.bf16.mxu0 %v1170
        %2080 = vmatmul.mubr.bf16.gmra.mrb[0].mxu0 %v1169
        %v2081 = vpop.f32.mrb[0].mxu0
        %v2082 = vadd.f32 %v1921, %v2081
        %v2083 = vpop.f32.mrb[0].mxu0
        %v2084 = vpop.f32.mrb[0].mxu0
        %v2085 = vadd.f32 %v1924, %v2084
        %v2086 = vpop.f32.mrb[0].mxu0
        %2087 = vmatprep.mubr.bf16.mxu0 %v1177
        %2088 = vmatmul.mubr.bf16.gmra.mrb[0].mxu0 %v1176
        %v2089 = vpop.f32.mrb[0].mxu0
        %v2090 = vadd.f32 %v1929, %v2089
        %v2091 = vpop.f32.mrb[0].mxu0
        %v2092 = vpop.f32.mrb[0].mxu0
        %v2093 = vadd.f32 %v1932, %v2092
        %v2094 = vpop.f32.mrb[0].mxu0
        %2095 = vmatprep.mubr.bf16.mxu0 %v1184
        %2096 = vmatmul.mubr.bf16.gmra.mrb[0].mxu0 %v1183
        %v2097 = vpop.f32.mrb[0].mxu0
        %v2098 = vadd.f32 %v1937, %v2097
        %v2099 = vpop.f32.mrb[0].mxu0
        %v2100 = vpop.f32.mrb[0].mxu0
        %v2101 = vadd.f32 %v1940, %v2100
        %v2102 = vpop.f32.mrb[0].mxu0
        %2103 = vmatprep.mubr.bf16.mxu0 %v1191
        %2104 = vmatmul.mubr.bf16.gmra.mrb[0].mxu0 %v1190
        %v2105 = vpop.f32.mrb[0].mxu0
        %v2106 = vadd.f32 %v1945, %v2105
        %v2107 = vpop.f32.mrb[0].mxu0
        %v2108 = vpop.f32.mrb[0].mxu0
        %v2109 = vadd.f32 %v1948, %v2108
        %v2110 = vpop.f32.mrb[0].mxu0
        %2111 = vmatprep.mubr.bf16.mxu0 %v1198
        %2112 = vmatmul.mubr.bf16.gmra.mrb[0].mxu0 %v1197
        %v2113 = vpop.f32.mrb[0].mxu0
        %v2114 = vadd.f32 %v1953, %v2113
        %v2115 = vpop.f32.mrb[0].mxu0
        %v2116 = vpop.f32.mrb[0].mxu0
        %v2117 = vadd.f32 %v1956, %v2116
        %v2118 = vpop.f32.mrb[0].mxu0
        %2119 = vmatprep.mubr.bf16.mxu0 %v1205
        %2120 = vmatmul.mubr.bf16.gmra.mrb[0].mxu0 %v1204
        %v2121 = vpop.f32.mrb[0].mxu0
        %v2122 = vadd.f32 %v1961, %v2121
        %v2123 = vpop.f32.mrb[0].mxu0
        %v2124 = vpop.f32.mrb[0].mxu0
        %v2125 = vadd.f32 %v1964, %v2124
        %v2126 = vpop.f32.mrb[0].mxu0
        %2127 = vmatprep.mubr.bf16.mxu0 %v1212
        %2128 = vmatmul.mubr.bf16.gmra.mrb[0].mxu0 %v1211
        %v2129 = vpop.f32.mrb[0].mxu0
        %v2130 = vadd.f32 %v1969, %v2129
        %v2131 = vpop.f32.mrb[0].mxu0
        %v2132 = vpop.f32.mrb[0].mxu0
        %v2133 = vadd.f32 %v1972, %v2132
        %v2134 = vpop.f32.mrb[0].mxu0
        %2135 = vmatprep.mubr.bf16.mxu0 %v1219
        %2136 = vmatmul.mubr.bf16.gmra.mrb[0].mxu0 %v1218
        %v2137 = vpop.f32.mrb[0].mxu0
        %v2138 = vadd.f32 %v1977, %v2137
        %v2139 = vpop.f32.mrb[0].mxu0
        %v2140 = vpop.f32.mrb[0].mxu0
        %v2141 = vadd.f32 %v1980, %v2140
        %v2142 = vpop.f32.mrb[0].mxu0
        %2143 = vmatprep.mubr.bf16.mxu0 %v1226
        %2144 = vmatmul.mubr.bf16.gmra.mrb[0].mxu0 %v1225
        %v2145 = vpop.f32.mrb[0].mxu0
        %v2146 = vadd.f32 %v1985, %v2145
        %v2147 = vpop.f32.mrb[0].mxu0
        %v2148 = vpop.f32.mrb[0].mxu0
        %v2149 = vadd.f32 %v1988, %v2148
        %v2150 = vpop.f32.mrb[0].mxu0
        %2151 = vmatprep.mubr.bf16.mxu0 %v1233
        %2152 = vmatmul.mubr.bf16.gmra.mrb[0].mxu0 %v1232
        %v2153 = vpop.f32.mrb[0].mxu0
        %v2154 = vadd.f32 %v1993, %v2153
        %v2155 = vpop.f32.mrb[0].mxu0
        %v2156 = vpop.f32.mrb[0].mxu0
        %v2157 = vadd.f32 %v1996, %v2156
        %v2158 = vpop.f32.mrb[0].mxu0
        %2159 = vmatprep.mubr.bf16.mxu0 %v1240
        %2160 = vmatmul.mubr.bf16.gmra.mrb[0].mxu0 %v1239
        %v2161 = vpop.f32.mrb[0].mxu0
        %v2162 = vadd.f32 %v2001, %v2161
        %v2163 = vpop.f32.mrb[0].mxu0
        %v2164 = vpop.f32.mrb[0].mxu0
        %v2165 = vadd.f32 %v2004, %v2164
        %v2166 = vpop.f32.mrb[0].mxu0
        %2167 = vmatprep.mubr.bf16.mxu0 %v1247
        %2168 = vmatmul.mubr.bf16.gmra.mrb[0].mxu0 %v1246
        %v2169 = vpop.f32.mrb[0].mxu0
        %v2170 = vadd.f32 %v2009, %v2169
        %v2171 = vpop.f32.mrb[0].mxu0
        %v2172 = vpop.f32.mrb[0].mxu0
        %v2173 = vadd.f32 %v2012, %v2172
        %v2174 = vpop.f32.mrb[0].mxu0
        %2175 = vmatprep.mubr.bf16.mxu0 %v1254
        %2176 = vmatmul.mubr.bf16.gmra.mrb[0].mxu0 %v1253
        %v2177 = vpop.f32.mrb[0].mxu0
        %v2178 = vadd.f32 %v2017, %v2177
        %v2179 = vpop.f32.mrb[0].mxu0
        %v2180 = vpop.f32.mrb[0].mxu0
        %v2181 = vadd.f32 %v2020, %v2180
        %v2182 = vpop.f32.mrb[0].mxu0
        %2183 = vmatprep.mubr.bf16.mxu0 %v1261
        %2184 = vmatmul.mubr.bf16.gmra.mrb[0].mxu0 %v1260
        %v2185 = vpop.f32.mrb[0].mxu0
        %v2186 = vadd.f32 %v2025, %v2185
        %v2187 = vpop.f32.mrb[0].mxu0
        %v2188 = vpop.f32.mrb[0].mxu0
        %v2189 = vadd.f32 %v2028, %v2188
        %v2190 = vpop.f32.mrb[0].mxu0
        %2191 = vmatprep.mubr.bf16.mxu0 %v1268
        %2192 = vmatmul.mubr.bf16.gmra.mrb[0].mxu0 %v1267
        %v2193 = vpop.f32.mrb[0].mxu0
        %v2194 = vadd.f32 %v2033, %v2193
        %v2195 = vpop.f32.mrb[0].mxu0
        %v2196 = vpop.f32.mrb[0].mxu0
        %v2197 = vadd.f32 %v2036, %v2196
        %v2198 = vpop.f32.mrb[0].mxu0
        %2199 = vmatprep.mubr.bf16.mxu0 %v1275
        %2200 = vmatmul.mubr.bf16.gmra.mrb[0].mxu0 %v1274
        %v2201 = vpop.f32.mrb[0].mxu0
        %v2202 = vadd.f32 %v2041, %v2201
        %v2203 = vpop.f32.mrb[0].mxu0
        %v2204 = vpop.f32.mrb[0].mxu0
        %v2205 = vadd.f32 %v2044, %v2204
        %v2206 = vpop.f32.mrb[0].mxu0
        %2207 = vdwg.mxu0
        %2208 = vmatprep.subr.bf16.mxu0 0
        %2209 = vmatpush1.bf16.msra.mxu0 %v1661
        %2210 = vmatprep.subr.bf16.mxu0 0
        %2211 = vmatpush1.bf16.msra.mxu0 %v1662
        %2212 = vmatprep.subr.bf16.mxu0 0
        %2213 = vmatpush1.bf16.msra.mxu0 %v1663
        %2214 = vmatprep.subr.bf16.mxu0 0
        %2215 = vmatpush1.bf16.msra.mxu0 %v1664
        %2216 = vmatprep.subr.bf16.mxu0 0
        %2217 = vmatpush1.bf16.msra.mxu0 %v1665
        %2218 = vmatprep.subr.bf16.mxu0 0
        %2219 = vmatpush1.bf16.msra.mxu0 %v1666
        %2220 = vmatprep.subr.bf16.mxu0 0
        %2221 = vmatpush1.bf16.msra.mxu0 %v1667
        %2222 = vmatprep.subr.bf16.mxu0 0
        %2223 = vmatpush1.bf16.msra.mxu0 %v1668
        %2224 = vmatprep.subr.bf16.mxu0 0
        %2225 = vmatpush1.bf16.msra.mxu0 0
        %2226 = vmatprep.subr.bf16.mxu0 0
        %2227 = vmatpush1.bf16.msra.mxu0 0
        %2228 = vmatprep.subr.bf16.mxu0 0
        %2229 = vmatpush1.bf16.msra.mxu0 0
        %2230 = vmatprep.subr.bf16.mxu0 0
        %2231 = vmatpush1.bf16.msra.mxu0 0
        %2232 = vmatprep.subr.bf16.mxu0 0
        %2233 = vmatpush1.bf16.msra.mxu0 0
        %2234 = vmatprep.subr.bf16.mxu0 0
        %2235 = vmatpush1.bf16.msra.mxu0 0
        %2236 = vmatprep.subr.bf16.mxu0 0
        %2237 = vmatpush1.bf16.msra.mxu0 0
        %2238 = vmatprep.subr.bf16.mxu0 0
        %2239 = vmatpush1.bf16.msra.mxu0 0
        %2240 = vmatprep.mubr.bf16.mxu0 0
        %2241 = vmatmul.mubr.bf16.gmra.mrb[0].mxu0 %v1171
        %v2242 = vpop.f32.mrb[0].mxu0
        %v2243 = vadd.f32 %v2082, %v2242
        %v2244 = vpop.f32.mrb[0].mxu0
        %v2245 = vpop.f32.mrb[0].mxu0
        %v2246 = vadd.f32 %v2085, %v2245
        %v2247 = vpop.f32.mrb[0].mxu0
        %2248 = vmatprep.mubr.bf16.mxu0 0
        %2249 = vmatmul.mubr.bf16.gmra.mrb[0].mxu0 %v1178
        %v2250 = vpop.f32.mrb[0].mxu0
        %v2251 = vadd.f32 %v2090, %v2250
        %v2252 = vpop.f32.mrb[0].mxu0
        %v2253 = vpop.f32.mrb[0].mxu0
        %v2254 = vadd.f32 %v2093, %v2253
        %v2255 = vpop.f32.mrb[0].mxu0
        %2256 = vmatprep.mubr.bf16.mxu0 0
        %2257 = vmatmul.mubr.bf16.gmra.mrb[0].mxu0 %v1185
        %v2258 = vpop.f32.mrb[0].mxu0
        %v2259 = vadd.f32 %v2098, %v2258
        %v2260 = vpop.f32.mrb[0].mxu0
        %v2261 = vpop.f32.mrb[0].mxu0
        %v2262 = vadd.f32 %v2101, %v2261
        %v2263 = vpop.f32.mrb[0].mxu0
        %2264 = vmatprep.mubr.bf16.mxu0 0
        %2265 = vmatmul.mubr.bf16.gmra.mrb[0].mxu0 %v1192
        %v2266 = vpop.f32.mrb[0].mxu0
        %v2267 = vadd.f32 %v2106, %v2266
        %v2268 = vpop.f32.mrb[0].mxu0
        %v2269 = vpop.f32.mrb[0].mxu0
        %v2270 = vadd.f32 %v2109, %v2269
        %v2271 = vpop.f32.mrb[0].mxu0
        %2272 = vmatprep.mubr.bf16.mxu0 0
        %2273 = vmatmul.mubr.bf16.gmra.mrb[0].mxu0 %v1199
        %v2274 = vpop.f32.mrb[0].mxu0
        %v2275 = vadd.f32 %v2114, %v2274
        %v2276 = vpop.f32.mrb[0].mxu0
        %v2277 = vpop.f32.mrb[0].mxu0
        %v2278 = vadd.f32 %v2117, %v2277
        %v2279 = vpop.f32.mrb[0].mxu0
        %2280 = vmatprep.mubr.bf16.mxu0 0
        %2281 = vmatmul.mubr.bf16.gmra.mrb[0].mxu0 %v1206
        %v2282 = vpop.f32.mrb[0].mxu0
        %v2283 = vadd.f32 %v2122, %v2282
        %v2284 = vpop.f32.mrb[0].mxu0
        %v2285 = vpop.f32.mrb[0].mxu0
        %v2286 = vadd.f32 %v2125, %v2285
        %v2287 = vpop.f32.mrb[0].mxu0
        %2288 = vmatprep.mubr.bf16.mxu0 0
        %2289 = vmatmul.mubr.bf16.gmra.mrb[0].mxu0 %v1213
        %v2290 = vpop.f32.mrb[0].mxu0
        %v2291 = vadd.f32 %v2130, %v2290
        %v2292 = vpop.f32.mrb[0].mxu0
        %v2293 = vpop.f32.mrb[0].mxu0
        %v2294 = vadd.f32 %v2133, %v2293
        %v2295 = vpop.f32.mrb[0].mxu0
        %2296 = vmatprep.mubr.bf16.mxu0 0
        %2297 = vmatmul.mubr.bf16.gmra.mrb[0].mxu0 %v1220
        %v2298 = vpop.f32.mrb[0].mxu0
        %v2299 = vadd.f32 %v2138, %v2298
        %v2300 = vpop.f32.mrb[0].mxu0
        %v2301 = vpop.f32.mrb[0].mxu0
        %v2302 = vadd.f32 %v2141, %v2301
        %v2303 = vpop.f32.mrb[0].mxu0
        %2304 = vmatprep.mubr.bf16.mxu0 0
        %2305 = vmatmul.mubr.bf16.gmra.mrb[0].mxu0 %v1227
        %v2306 = vpop.f32.mrb[0].mxu0
        %v2307 = vadd.f32 %v2146, %v2306
        %v2308 = vpop.f32.mrb[0].mxu0
        %v2309 = vpop.f32.mrb[0].mxu0
        %v2310 = vadd.f32 %v2149, %v2309
        %v2311 = vpop.f32.mrb[0].mxu0
        %2312 = vmatprep.mubr.bf16.mxu0 0
        %2313 = vmatmul.mubr.bf16.gmra.mrb[0].mxu0 %v1234
        %v2314 = vpop.f32.mrb[0].mxu0
        %v2315 = vadd.f32 %v2154, %v2314
        %v2316 = vpop.f32.mrb[0].mxu0
        %v2317 = vpop.f32.mrb[0].mxu0
        %v2318 = vadd.f32 %v2157, %v2317
        %v2319 = vpop.f32.mrb[0].mxu0
        %2320 = vmatprep.mubr.bf16.mxu0 0
        %2321 = vmatmul.mubr.bf16.gmra.mrb[0].mxu0 %v1241
        %v2322 = vpop.f32.mrb[0].mxu0
        %v2323 = vadd.f32 %v2162, %v2322
        %v2324 = vpop.f32.mrb[0].mxu0
        %v2325 = vpop.f32.mrb[0].mxu0
        %v2326 = vadd.f32 %v2165, %v2325
        %v2327 = vpop.f32.mrb[0].mxu0
        %2328 = vmatprep.mubr.bf16.mxu0 0
        %2329 = vmatmul.mubr.bf16.gmra.mrb[0].mxu0 %v1248
        %v2330 = vpop.f32.mrb[0].mxu0
        %v2331 = vadd.f32 %v2170, %v2330
        %v2332 = vpop.f32.mrb[0].mxu0
        %v2333 = vpop.f32.mrb[0].mxu0
        %v2334 = vadd.f32 %v2173, %v2333
        %v2335 = vpop.f32.mrb[0].mxu0
        %2336 = vmatprep.mubr.bf16.mxu0 0
        %2337 = vmatmul.mubr.bf16.gmra.mrb[0].mxu0 %v1255
        %v2338 = vpop.f32.mrb[0].mxu0
        %v2339 = vadd.f32 %v2178, %v2338
        %v2340 = vpop.f32.mrb[0].mxu0
        %v2341 = vpop.f32.mrb[0].mxu0
        %v2342 = vadd.f32 %v2181, %v2341
        %v2343 = vpop.f32.mrb[0].mxu0
        %2344 = vmatprep.mubr.bf16.mxu0 0
        %2345 = vmatmul.mubr.bf16.gmra.mrb[0].mxu0 %v1262
        %v2346 = vpop.f32.mrb[0].mxu0
        %v2347 = vadd.f32 %v2186, %v2346
        %v2348 = vpop.f32.mrb[0].mxu0
        %v2349 = vpop.f32.mrb[0].mxu0
        %v2350 = vadd.f32 %v2189, %v2349
        %v2351 = vpop.f32.mrb[0].mxu0
        %2352 = vmatprep.mubr.bf16.mxu0 0
        %2353 = vmatmul.mubr.bf16.gmra.mrb[0].mxu0 %v1269
        %v2354 = vpop.f32.mrb[0].mxu0
        %v2355 = vadd.f32 %v2194, %v2354
        %v2356 = vpop.f32.mrb[0].mxu0
        %v2357 = vpop.f32.mrb[0].mxu0
        %v2358 = vadd.f32 %v2197, %v2357
        %v2359 = vpop.f32.mrb[0].mxu0
        %2360 = vmatprep.mubr.bf16.mxu0 0
        %2361 = vmatmul.mubr.bf16.gmra.mrb[0].mxu0 %v1276
        %v2362 = vpop.f32.mrb[0].mxu0
        %v2363 = vadd.f32 %v2202, %v2362
        %v2364 = vpop.f32.mrb[0].mxu0
        %v2365 = vpop.f32.mrb[0].mxu0
        %v2366 = vadd.f32 %v2205, %v2365
        %v2367 = vpop.f32.mrb[0].mxu0
        %2368 = vdwg.mxu0
        %v2369 = vadd.f32 %v541, %v2243
        %v2370 = vadd.f32 %v542, %v2246
        %v2371 = vadd.f32 %v543, %v2251
        %v2372 = vadd.f32 %v544, %v2254
        %v2373 = vadd.f32 %v545, %v2259
        %v2374 = vadd.f32 %v546, %v2262
        %v2375 = vadd.f32 %v547, %v2267
        %v2376 = vadd.f32 %v548, %v2270
        %v2377 = vadd.f32 %v549, %v2275
        %v2378 = vadd.f32 %v550, %v2278
        %v2379 = vadd.f32 %v551, %v2283
        %v2380 = vadd.f32 %v552, %v2286
        %v2381 = vadd.f32 %v553, %v2291
        %v2382 = vadd.f32 %v554, %v2294
        %v2383 = vadd.f32 %v555, %v2299
        %v2384 = vadd.f32 %v556, %v2302
        %v2385 = vadd.f32 %v557, %v2307
        %v2386 = vadd.f32 %v558, %v2310
        %v2387 = vadd.f32 %v559, %v2315
        %v2388 = vadd.f32 %v560, %v2318
        %v2389 = vadd.f32 %v561, %v2323
        %v2390 = vadd.f32 %v562, %v2326
        %v2391 = vadd.f32 %v563, %v2331
        %v2392 = vadd.f32 %v564, %v2334
        %v2393 = vadd.f32 %v565, %v2339
        %v2394 = vadd.f32 %v566, %v2342
        %v2395 = vadd.f32 %v567, %v2347
        %v2396 = vadd.f32 %v568, %v2350
        %v2397 = vadd.f32 %v569, %v2355
        %v2398 = vadd.f32 %v570, %v2358
        %v2399 = vadd.f32 %v571, %v2363
        %v2400 = vadd.f32 %v572, %v2366
        %vm2401 = vcmask 293888
        %2402 = vst.msk [vmem:[#allocation2] sm:$0xff] %vm2401, %v2369
        %2403 = vst.msk [vmem:[#allocation2 + $0x8] sm:$0xff] %vm2401, %v2370
        %2404 = vst.msk [vmem:[#allocation2 + $0x10] sm:$0xff] %vm2401, %v2371
        %2405 = vst.msk [vmem:[#allocation2 + $0x18] sm:$0xff] %vm2401, %v2372
        %2406 = vst.msk [vmem:[#allocation2 + $0x20] sm:$0xff] %vm2401, %v2373
        %2407 = vst.msk [vmem:[#allocation2 + $0x28] sm:$0xff] %vm2401, %v2374
        %2408 = vst.msk [vmem:[#allocation2 + $0x30] sm:$0xff] %vm2401, %v2375
        %2409 = vst.msk [vmem:[#allocation2 + $0x38] sm:$0xff] %vm2401, %v2376
        %2410 = vst.msk [vmem:[#allocation2 + $0x40] sm:$0xff] %vm2401, %v2377
        %2411 = vst.msk [vmem:[#allocation2 + $0x48] sm:$0xff] %vm2401, %v2378
        %2412 = vst.msk [vmem:[#allocation2 + $0x50] sm:$0xff] %vm2401, %v2379
        %2413 = vst.msk [vmem:[#allocation2 + $0x58] sm:$0xff] %vm2401, %v2380
        %2414 = vst.msk [vmem:[#allocation2 + $0x60] sm:$0xff] %vm2401, %v2381
        %2415 = vst.msk [vmem:[#allocation2 + $0x68] sm:$0xff] %vm2401, %v2382
        %2416 = vst.msk [vmem:[#allocation2 + $0x70] sm:$0xff] %vm2401, %v2383
        %2417 = vst.msk [vmem:[#allocation2 + $0x78] sm:$0xff] %vm2401, %v2384
        %2418 = vst.msk [vmem:[#allocation2 + $0x80] sm:$0xff] %vm2401, %v2385
        %2419 = vst.msk [vmem:[#allocation2 + $0x88] sm:$0xff] %vm2401, %v2386
        %2420 = vst.msk [vmem:[#allocation2 + $0x90] sm:$0xff] %vm2401, %v2387
        %2421 = vst.msk [vmem:[#allocation2 + $0x98] sm:$0xff] %vm2401, %v2388
        %2422 = vst.msk [vmem:[#allocation2 + $0xa0] sm:$0xff] %vm2401, %v2389
        %2423 = vst.msk [vmem:[#allocation2 + $0xa8] sm:$0xff] %vm2401, %v2390
        %2424 = vst.msk [vmem:[#allocation2 + $0xb0] sm:$0xff] %vm2401, %v2391
        %2425 = vst.msk [vmem:[#allocation2 + $0xb8] sm:$0xff] %vm2401, %v2392
        %2426 = vst.msk [vmem:[#allocation2 + $0xc0] sm:$0xff] %vm2401, %v2393
        %2427 = vst.msk [vmem:[#allocation2 + $0xc8] sm:$0xff] %vm2401, %v2394
        %2428 = vst.msk [vmem:[#allocation2 + $0xd0] sm:$0xff] %vm2401, %v2395
        %2429 = vst.msk [vmem:[#allocation2 + $0xd8] sm:$0xff] %vm2401, %v2396
        %2430 = vst.msk [vmem:[#allocation2 + $0xe0] sm:$0xff] %vm2401, %v2397
        %2431 = vst.msk [vmem:[#allocation2 + $0xe8] sm:$0xff] %vm2401, %v2398
        %2432 = vst.msk [vmem:[#allocation2 + $0xf0] sm:$0xff] %vm2401, %v2399
        %2433 = vst.msk [vmem:[#allocation2 + $0xf8] sm:$0xff] %vm2401, %v2400
        %p2434 = scmp.eq.s32.totalorder %s19, 2
        // Predicated region
        $region63: #{primary_caps_forward.2} parent=53 // pred_check
          %p2435 = pneg %p2434
        $region64: #{primary_caps_forward.2} parent=53 // pred_check_branch
          %2437 = sbr.rel (%p2435) target = $region66
        $region65: #{primary_caps_forward.2} parent=53 // pred_region
          %v2438 = vld [vmem:[#allocation2] sm:$0xff]
          %v2439 = vld [vmem:[#allocation2 + $0x8] sm:$0xff]
          %v2440 = vld [vmem:[#allocation2 + $0x10] sm:$0xff]
          %v2441 = vld [vmem:[#allocation2 + $0x18] sm:$0xff]
          %v2442 = vld [vmem:[#allocation2 + $0x20] sm:$0xff]
          %v2443 = vld [vmem:[#allocation2 + $0x28] sm:$0xff]
          %v2444 = vld [vmem:[#allocation2 + $0x30] sm:$0xff]
          %v2445 = vld [vmem:[#allocation2 + $0x38] sm:$0xff]
          %v2446 = vld [vmem:[#allocation2 + $0x40] sm:$0xff]
          %v2447 = vld [vmem:[#allocation2 + $0x48] sm:$0xff]
          %v2448 = vld [vmem:[#allocation2 + $0x50] sm:$0xff]
          %v2449 = vld [vmem:[#allocation2 + $0x58] sm:$0xff]
          %v2450 = vld [vmem:[#allocation2 + $0x60] sm:$0xff]
          %v2451 = vld [vmem:[#allocation2 + $0x68] sm:$0xff]
          %v2452 = vld [vmem:[#allocation2 + $0x70] sm:$0xff]
          %v2453 = vld [vmem:[#allocation2 + $0x78] sm:$0xff]
          %v2454 = vld [vmem:[#allocation2 + $0x80] sm:$0xff]
          %v2455 = vld [vmem:[#allocation2 + $0x88] sm:$0xff]
          %v2456 = vld [vmem:[#allocation2 + $0x90] sm:$0xff]
          %v2457 = vld [vmem:[#allocation2 + $0x98] sm:$0xff]
          %v2458 = vld [vmem:[#allocation2 + $0xa0] sm:$0xff]
          %v2459 = vld [vmem:[#allocation2 + $0xa8] sm:$0xff]
          %v2460 = vld [vmem:[#allocation2 + $0xb0] sm:$0xff]
          %v2461 = vld [vmem:[#allocation2 + $0xb8] sm:$0xff]
          %v2462 = vld [vmem:[#allocation2 + $0xc0] sm:$0xff]
          %v2463 = vld [vmem:[#allocation2 + $0xc8] sm:$0xff]
          %v2464 = vld [vmem:[#allocation2 + $0xd0] sm:$0xff]
          %v2465 = vld [vmem:[#allocation2 + $0xd8] sm:$0xff]
          %v2466 = vld [vmem:[#allocation2 + $0xe0] sm:$0xff]
          %v2467 = vld [vmem:[#allocation2 + $0xe8] sm:$0xff]
          %v2468 = vld [vmem:[#allocation2 + $0xf0] sm:$0xff]
          %v2469 = vld [vmem:[#allocation2 + $0xf8] sm:$0xff]
          %v2470 = vld [vmem:[%s2] sm:$0xff]
          %v2471 = vld [vmem:[%s2 + $0x8] sm:$0xff]
          %v2472 = vld [vmem:[%s2 + $0x10] sm:$0xff]
          %v2473 = vld [vmem:[%s2 + $0x18] sm:$0xff]
          %v2474 = vld [vmem:[%s2 + $0x20] sm:$0xff]
          %v2475 = vld [vmem:[%s2 + $0x28] sm:$0xff]
          %v2476 = vld [vmem:[%s2 + $0x30] sm:$0xff]
          %v2477 = vld [vmem:[%s2 + $0x38] sm:$0xff]
          %v2478 = vld [vmem:[%s2 + $0x40] sm:$0xff]
          %v2479 = vld [vmem:[%s2 + $0x48] sm:$0xff]
          %v2480 = vld [vmem:[%s2 + $0x50] sm:$0xff]
          %v2481 = vld [vmem:[%s2 + $0x58] sm:$0xff]
          %v2482 = vld [vmem:[%s2 + $0x60] sm:$0xff]
          %v2483 = vld [vmem:[%s2 + $0x68] sm:$0xff]
          %v2484 = vld [vmem:[%s2 + $0x70] sm:$0xff]
          %v2485 = vld [vmem:[%s2 + $0x78] sm:$0xff]
          %v2486 = vld [vmem:[%s2 + $0x80] sm:$0xff]
          %v2487 = vld [vmem:[%s2 + $0x88] sm:$0xff]
          %v2488 = vld [vmem:[%s2 + $0x90] sm:$0xff]
          %v2489 = vld [vmem:[%s2 + $0x98] sm:$0xff]
          %v2490 = vld [vmem:[%s2 + $0xa0] sm:$0xff]
          %v2491 = vld [vmem:[%s2 + $0xa8] sm:$0xff]
          %v2492 = vld [vmem:[%s2 + $0xb0] sm:$0xff]
          %v2493 = vld [vmem:[%s2 + $0xb8] sm:$0xff]
          %v2494 = vld [vmem:[%s2 + $0xc0] sm:$0xff]
          %v2495 = vld [vmem:[%s2 + $0xc8] sm:$0xff]
          %v2496 = vld [vmem:[%s2 + $0xd0] sm:$0xff]
          %v2497 = vld [vmem:[%s2 + $0xd8] sm:$0xff]
          %v2498 = vld [vmem:[%s2 + $0xe0] sm:$0xff]
          %v2499 = vld [vmem:[%s2 + $0xe8] sm:$0xff]
          %v2500 = vld [vmem:[%s2 + $0xf0] sm:$0xff]
          %v2501 = vld [vmem:[%s2 + $0xf8] sm:$0xff]
          %2503 = vset.pattern.permute.xlu0 0
          %2504 = vperm.xlu0 %2503, %v2470
          %v2505 = vpop.permute.xlu0 %2504
          %2508 = vset.pattern.permute.xlu0 0
          %2509 = vperm.xlu0 %2508, %v2471
          %v2510 = vpop.permute.xlu0 %2509
          %2513 = vset.pattern.permute.xlu0 0
          %2514 = vperm.xlu0 %2513, %v2472
          %v2515 = vpop.permute.xlu0 %2514
          %2518 = vset.pattern.permute.xlu0 0
          %2519 = vperm.xlu0 %2518, %v2473
          %v2520 = vpop.permute.xlu0 %2519
          %2523 = vset.pattern.permute.xlu0 0
          %2524 = vperm.xlu0 %2523, %v2474
          %v2525 = vpop.permute.xlu0 %2524
          %2528 = vset.pattern.permute.xlu0 0
          %2529 = vperm.xlu0 %2528, %v2475
          %v2530 = vpop.permute.xlu0 %2529
          %2533 = vset.pattern.permute.xlu0 0
          %2534 = vperm.xlu0 %2533, %v2476
          %v2535 = vpop.permute.xlu0 %2534
          %2538 = vset.pattern.permute.xlu0 0
          %2539 = vperm.xlu0 %2538, %v2477
          %v2540 = vpop.permute.xlu0 %2539
          %2543 = vset.pattern.permute.xlu0 0
          %2544 = vperm.xlu0 %2543, %v2478
          %v2545 = vpop.permute.xlu0 %2544
          %2548 = vset.pattern.permute.xlu0 0
          %2549 = vperm.xlu0 %2548, %v2479
          %v2550 = vpop.permute.xlu0 %2549
          %2553 = vset.pattern.permute.xlu0 0
          %2554 = vperm.xlu0 %2553, %v2480
          %v2555 = vpop.permute.xlu0 %2554
          %2558 = vset.pattern.permute.xlu0 0
          %2559 = vperm.xlu0 %2558, %v2481
          %v2560 = vpop.permute.xlu0 %2559
          %2563 = vset.pattern.permute.xlu0 0
          %2564 = vperm.xlu0 %2563, %v2482
          %v2565 = vpop.permute.xlu0 %2564
          %2568 = vset.pattern.permute.xlu0 0
          %2569 = vperm.xlu0 %2568, %v2483
          %v2570 = vpop.permute.xlu0 %2569
          %2573 = vset.pattern.permute.xlu0 0
          %2574 = vperm.xlu0 %2573, %v2484
          %v2575 = vpop.permute.xlu0 %2574
          %2578 = vset.pattern.permute.xlu0 0
          %2579 = vperm.xlu0 %2578, %v2485
          %v2580 = vpop.permute.xlu0 %2579
          %2583 = vset.pattern.permute.xlu0 0
          %2584 = vperm.xlu0 %2583, %v2486
          %v2585 = vpop.permute.xlu0 %2584
          %2588 = vset.pattern.permute.xlu0 0
          %2589 = vperm.xlu0 %2588, %v2487
          %v2590 = vpop.permute.xlu0 %2589
          %2593 = vset.pattern.permute.xlu0 0
          %2594 = vperm.xlu0 %2593, %v2488
          %v2595 = vpop.permute.xlu0 %2594
          %2598 = vset.pattern.permute.xlu0 0
          %2599 = vperm.xlu0 %2598, %v2489
          %v2600 = vpop.permute.xlu0 %2599
          %2603 = vset.pattern.permute.xlu0 0
          %2604 = vperm.xlu0 %2603, %v2490
          %v2605 = vpop.permute.xlu0 %2604
          %2608 = vset.pattern.permute.xlu0 0
          %2609 = vperm.xlu0 %2608, %v2491
          %v2610 = vpop.permute.xlu0 %2609
          %2613 = vset.pattern.permute.xlu0 0
          %2614 = vperm.xlu0 %2613, %v2492
          %v2615 = vpop.permute.xlu0 %2614
          %2618 = vset.pattern.permute.xlu0 0
          %2619 = vperm.xlu0 %2618, %v2493
          %v2620 = vpop.permute.xlu0 %2619
          %2623 = vset.pattern.permute.xlu0 0
          %2624 = vperm.xlu0 %2623, %v2494
          %v2625 = vpop.permute.xlu0 %2624
          %2628 = vset.pattern.permute.xlu0 0
          %2629 = vperm.xlu0 %2628, %v2495
          %v2630 = vpop.permute.xlu0 %2629
          %2633 = vset.pattern.permute.xlu0 0
          %2634 = vperm.xlu0 %2633, %v2496
          %v2635 = vpop.permute.xlu0 %2634
          %2638 = vset.pattern.permute.xlu0 0
          %2639 = vperm.xlu0 %2638, %v2497
          %v2640 = vpop.permute.xlu0 %2639
          %2643 = vset.pattern.permute.xlu0 0
          %2644 = vperm.xlu0 %2643, %v2498
          %v2645 = vpop.permute.xlu0 %2644
          %2648 = vset.pattern.permute.xlu0 0
          %2649 = vperm.xlu0 %2648, %v2499
          %v2650 = vpop.permute.xlu0 %2649
          %2653 = vset.pattern.permute.xlu0 0
          %2654 = vperm.xlu0 %2653, %v2500
          %v2655 = vpop.permute.xlu0 %2654
          %2658 = vset.pattern.permute.xlu0 0
          %2659 = vperm.xlu0 %2658, %v2501
          %v2660 = vpop.permute.xlu0 %2659
          %v2662 = vadd.f32 %v2438, %v2505
          %v2663 = vadd.f32 %v2439, %v2510
          %v2664 = vadd.f32 %v2440, %v2515
          %v2665 = vadd.f32 %v2441, %v2520
          %v2666 = vadd.f32 %v2442, %v2525
          %v2667 = vadd.f32 %v2443, %v2530
          %v2668 = vadd.f32 %v2444, %v2535
          %v2669 = vadd.f32 %v2445, %v2540
          %v2670 = vadd.f32 %v2446, %v2545
          %v2671 = vadd.f32 %v2447, %v2550
          %v2672 = vadd.f32 %v2448, %v2555
          %v2673 = vadd.f32 %v2449, %v2560
          %v2674 = vadd.f32 %v2450, %v2565
          %v2675 = vadd.f32 %v2451, %v2570
          %v2676 = vadd.f32 %v2452, %v2575
          %v2677 = vadd.f32 %v2453, %v2580
          %v2678 = vadd.f32 %v2454, %v2585
          %v2679 = vadd.f32 %v2455, %v2590
          %v2680 = vadd.f32 %v2456, %v2595
          %v2681 = vadd.f32 %v2457, %v2600
          %v2682 = vadd.f32 %v2458, %v2605
          %v2683 = vadd.f32 %v2459, %v2610
          %v2684 = vadd.f32 %v2460, %v2615
          %v2685 = vadd.f32 %v2461, %v2620
          %v2686 = vadd.f32 %v2462, %v2625
          %v2687 = vadd.f32 %v2463, %v2630
          %v2688 = vadd.f32 %v2464, %v2635
          %v2689 = vadd.f32 %v2465, %v2640
          %v2690 = vadd.f32 %v2466, %v2645
          %v2691 = vadd.f32 %v2467, %v2650
          %v2692 = vadd.f32 %v2468, %v2655
          %v2693 = vadd.f32 %v2469, %v2660
          %2694 = vst.msk [vmem:[%s502] sm:$0xff] %vm2401, %v2662
          %2695 = vst.msk [vmem:[%s502 + $0x8] sm:$0xff] %vm2401, %v2663
          %2696 = vst.msk [vmem:[%s502 + $0x10] sm:$0xff] %vm2401, %v2664
          %2697 = vst.msk [vmem:[%s502 + $0x18] sm:$0xff] %vm2401, %v2665
          %2698 = vst.msk [vmem:[%s502 + $0x20] sm:$0xff] %vm2401, %v2666
          %2699 = vst.msk [vmem:[%s502 + $0x28] sm:$0xff] %vm2401, %v2667
          %2700 = vst.msk [vmem:[%s502 + $0x30] sm:$0xff] %vm2401, %v2668
          %2701 = vst.msk [vmem:[%s502 + $0x38] sm:$0xff] %vm2401, %v2669
          %2702 = vst.msk [vmem:[%s502 + $0x40] sm:$0xff] %vm2401, %v2670
          %2703 = vst.msk [vmem:[%s502 + $0x48] sm:$0xff] %vm2401, %v2671
          %2704 = vst.msk [vmem:[%s502 + $0x50] sm:$0xff] %vm2401, %v2672
          %2705 = vst.msk [vmem:[%s502 + $0x58] sm:$0xff] %vm2401, %v2673
          %2706 = vst.msk [vmem:[%s502 + $0x60] sm:$0xff] %vm2401, %v2674
          %2707 = vst.msk [vmem:[%s502 + $0x68] sm:$0xff] %vm2401, %v2675
          %2708 = vst.msk [vmem:[%s502 + $0x70] sm:$0xff] %vm2401, %v2676
          %2709 = vst.msk [vmem:[%s502 + $0x78] sm:$0xff] %vm2401, %v2677
          %2710 = vst.msk [vmem:[%s502 + $0x80] sm:$0xff] %vm2401, %v2678
          %2711 = vst.msk [vmem:[%s502 + $0x88] sm:$0xff] %vm2401, %v2679
          %2712 = vst.msk [vmem:[%s502 + $0x90] sm:$0xff] %vm2401, %v2680
          %2713 = vst.msk [vmem:[%s502 + $0x98] sm:$0xff] %vm2401, %v2681
          %2714 = vst.msk [vmem:[%s502 + $0xa0] sm:$0xff] %vm2401, %v2682
          %2715 = vst.msk [vmem:[%s502 + $0xa8] sm:$0xff] %vm2401, %v2683
          %2716 = vst.msk [vmem:[%s502 + $0xb0] sm:$0xff] %vm2401, %v2684
          %2717 = vst.msk [vmem:[%s502 + $0xb8] sm:$0xff] %vm2401, %v2685
          %2718 = vst.msk [vmem:[%s502 + $0xc0] sm:$0xff] %vm2401, %v2686
          %2719 = vst.msk [vmem:[%s502 + $0xc8] sm:$0xff] %vm2401, %v2687
          %2720 = vst.msk [vmem:[%s502 + $0xd0] sm:$0xff] %vm2401, %v2688
          %2721 = vst.msk [vmem:[%s502 + $0xd8] sm:$0xff] %vm2401, %v2689
          %2722 = vst.msk [vmem:[%s502 + $0xe0] sm:$0xff] %vm2401, %v2690
          %2723 = vst.msk [vmem:[%s502 + $0xe8] sm:$0xff] %vm2401, %v2691
          %2724 = vst.msk [vmem:[%s502 + $0xf0] sm:$0xff] %vm2401, %v2692
          %2725 = vst.msk [vmem:[%s502 + $0xf8] sm:$0xff] %vm2401, %v2693
        $region66: #{primary_caps_forward.2} parent=53 // pred_fallthru
          _
        %p2726 = scmp.lt.s32.totalorder %s18, 1
        %s2727 = scalar_select %p2726, %s18, 1
        %s2728 = smul.addr %s2727, 32
        %s2729 = smul.addr %s2728, 8
        %s2730 = scalar_lea.vmem %s3, %s2729
        // Predicated region
        $region67: #{primary_caps_forward.2} parent=53 // pred_check
          %p2731 = pneg %p119
        $region68: #{primary_caps_forward.2} parent=53 // pred_check_branch
          %2733 = sbr.rel (%p2731) target = $region70
        $region69: #{primary_caps_forward.2} parent=53 // pred_region
          _
        $region70: #{primary_caps_forward.2} parent=53 // pred_fallthru
          _
      $region54: #{primary_caps_forward.2} parent=5 // pred_fallthru
        _
      %p2734 = scmp.le.s32.totalorder 2, %s9
      // Predicated region
      $region71: #{primary_caps_forward.2} parent=5 // pred_check
        %p2735 = pneg %p2734
      $region72: #{primary_caps_forward.2} parent=5 // pred_check_branch
        %2737 = sbr.rel (%p2735) target = $region74
      $region73: #{primary_caps_forward.2} parent=5 // pred_region
        %s2738 = ssub.s32 %s9, 2
        // Predicated region
        $region75: #{primary_caps_forward.2} parent=73 // pred_check
          %p2739 = pneg %p125
        $region76: #{primary_caps_forward.2} parent=73 // pred_check_branch
          %2741 = sbr.rel (%p2739) target = $region78
        $region77: #{primary_caps_forward.2} parent=73 // pred_region
          %p2742 = scmp.lt.s32.totalorder %s20, 1
          %s2743 = scalar_select %p2742, %s20, 1
          %s2744 = smul.addr %s2743, 32
          %s2745 = smul.addr %s2744, 8
          %s2746 = scalar_lea.vmem %s3, %s2745
        $region78: #{primary_caps_forward.2} parent=73 // pred_fallthru
          _
      $region74: #{primary_caps_forward.2} parent=5 // pred_fallthru
        _
    $region6: #{primary_caps_forward.2} parent=1 // loop_footer
      %s13 = sadd.s32 1, %s9
    $region7: #{primary_caps_forward.2} parent=1 // loop_footer_branch
      %8 = sbr.rel target = $region3
    $region8: #{primary_caps_forward.2} parent=1 // loop_exit
      _

// kernel: primary_caps_forward.3
$region0: #{primary_caps_forward.3}
  #allocation0 [shape = 'u32[]', space=smem, size = 0x4, offset = 0x4, fixed_abs, tag = 'smem constant byte address 0x4 - core index']
  #allocation1 [shape = 'u32[144,128]{1,0:T(1,128)}', space=vmem, size = 0x12000, scoped, tag = 'internal scratch']
  %s0 = inlined_call_operand.vmem [shape: f32[144,128], index: 0, kind: input, shape index: {}]
  %s1 = inlined_call_operand.vmem [shape: f32[128,128], index: 1, kind: input, shape index: {}]
  %s2 = inlined_call_operand.vmem [shape: f32[144,128], index: 2, kind: output, shape index: {}]
  %s3 = sld [smem:[#allocation0]]
  $region18: #{primary_caps_forward.3} parent=0
    _
  %s5 = ssub.s32 1, %s3
  %s6 = scalar_select 0, %s5, %s3
  // Predicated region
  $region2: #{primary_caps_forward.3} parent=0 // pred_check
    _
  $region3: #{primary_caps_forward.3} parent=0 // pred_check_branch
    %8 = sbr.rel (0) target = $region5
  $region4: #{primary_caps_forward.3} parent=0 // pred_region
    _
  $region5: #{primary_caps_forward.3} parent=0 // pred_fallthru
    _
  // Predicated region
  $region6: #{primary_caps_forward.3} parent=0 // pred_check
    _
  $region7: #{primary_caps_forward.3} parent=0 // pred_check_branch
    %10 = sbr.rel (0) target = $region9
  $region8: #{primary_caps_forward.3} parent=0 // pred_region
    _
  $region9: #{primary_caps_forward.3} parent=0 // pred_fallthru
    _
  %v11 = vld [vmem:[%s0] sm:$0xff]
  %v12 = vld [vmem:[%s0 + $0x8] sm:$0xff]
  %v13 = vld [vmem:[%s0 + $0x10] sm:$0xff]
  %v14 = vld [vmem:[%s0 + $0x18] sm:$0xff]
  %v15 = vld [vmem:[%s0 + $0x20] sm:$0xff]
  %v16 = vld [vmem:[%s0 + $0x28] sm:$0xff]
  %v17 = vld [vmem:[%s0 + $0x30] sm:$0xff]
  %v18 = vld [vmem:[%s0 + $0x38] sm:$0xff]
  %v19 = vld [vmem:[%s0 + $0x40] sm:$0xff]
  %v20 = vld [vmem:[%s0 + $0x48] sm:$0xff]
  %v21 = vld [vmem:[%s0 + $0x50] sm:$0xff]
  %v22 = vld [vmem:[%s0 + $0x58] sm:$0xff]
  %v23 = vld [vmem:[%s0 + $0x60] sm:$0xff]
  %v24 = vld [vmem:[%s0 + $0x68] sm:$0xff]
  %v25 = vld [vmem:[%s0 + $0x70] sm:$0xff]
  %v26 = vld [vmem:[%s0 + $0x78] sm:$0xff]
  %v27 = vld [vmem:[%s0 + $0x80] sm:$0xff]
  %v28 = vld [vmem:[%s0 + $0x88] sm:$0xff]
  %v29 = vmul.f32 %v11, %v11
  %v30 = vmul.f32 %v12, %v12
  %v31 = vmul.f32 %v13, %v13
  %v32 = vmul.f32 %v14, %v14
  %v33 = vmul.f32 %v15, %v15
  %v34 = vmul.f32 %v16, %v16
  %v35 = vmul.f32 %v17, %v17
  %v36 = vmul.f32 %v18, %v18
  %v37 = vmul.f32 %v19, %v19
  %v38 = vmul.f32 %v20, %v20
  %v39 = vmul.f32 %v21, %v21
  %v40 = vmul.f32 %v22, %v22
  %v41 = vmul.f32 %v23, %v23
  %v42 = vmul.f32 %v24, %v24
  %v43 = vmul.f32 %v25, %v25
  %v44 = vmul.f32 %v26, %v26
  %v45 = vmul.f32 %v27, %v27
  %v46 = vmul.f32 %v28, %v28
  %v47 = vld [vmem:[%s1] sm:$0xff]
  %v48 = vld [vmem:[%s1 + $0x8] sm:$0xff]
  %v49 = vld [vmem:[%s1 + $0x10] sm:$0xff]
  %v50 = vld [vmem:[%s1 + $0x18] sm:$0xff]
  %v51 = vld [vmem:[%s1 + $0x20] sm:$0xff]
  %v52 = vld [vmem:[%s1 + $0x28] sm:$0xff]
  %v53 = vld [vmem:[%s1 + $0x30] sm:$0xff]
  %v54 = vld [vmem:[%s1 + $0x38] sm:$0xff]
  %v55 = vld [vmem:[%s1 + $0x40] sm:$0xff]
  %v56 = vld [vmem:[%s1 + $0x48] sm:$0xff]
  %v57 = vld [vmem:[%s1 + $0x50] sm:$0xff]
  %v58 = vld [vmem:[%s1 + $0x58] sm:$0xff]
  %v59 = vld [vmem:[%s1 + $0x60] sm:$0xff]
  %v60 = vld [vmem:[%s1 + $0x68] sm:$0xff]
  %v61 = vld [vmem:[%s1 + $0x70] sm:$0xff]
  %v62 = vld [vmem:[%s1 + $0x78] sm:$0xff]
  %63 = vmatprep.subr.mxu0 0.0
  %64 = vmatpush1.msra.mxu0 %v47
  %65 = vmatprep.subr.mxu0 0.0
  %66 = vmatpush1.msra.mxu0 %v48
  %67 = vmatprep.subr.mxu0 0.0
  %68 = vmatpush1.msra.mxu0 %v49
  %69 = vmatprep.subr.mxu0 0.0
  %70 = vmatpush1.msra.mxu0 %v50
  %71 = vmatprep.subr.mxu0 0.0
  %72 = vmatpush1.msra.mxu0 %v51
  %73 = vmatprep.subr.mxu0 0.0
  %74 = vmatpush1.msra.mxu0 %v52
  %75 = vmatprep.subr.mxu0 0.0
  %76 = vmatpush1.msra.mxu0 %v53
  %77 = vmatprep.subr.mxu0 0.0
  %78 = vmatpush1.msra.mxu0 %v54
  %79 = vmatprep.subr.mxu0 0.0
  %80 = vmatpush1.msra.mxu0 %v55
  %81 = vmatprep.subr.mxu0 0.0
  %82 = vmatpush1.msra.mxu0 %v56
  %83 = vmatprep.subr.mxu0 0.0
  %84 = vmatpush1.msra.mxu0 %v57
  %85 = vmatprep.subr.mxu0 0.0
  %86 = vmatpush1.msra.mxu0 %v58
  %87 = vmatprep.subr.mxu0 0.0
  %88 = vmatpush1.msra.mxu0 %v59
  %89 = vmatprep.subr.mxu0 0.0
  %90 = vmatpush1.msra.mxu0 %v60
  %91 = vmatprep.subr.mxu0 0.0
  %92 = vmatpush1.msra.mxu0 %v61
  %93 = vmatprep.subr.mxu0 0.0
  %94 = vmatpush1.msra.mxu0 %v62
  %95 = vmatprep.subr.mxu0 0.0
  %96 = vmatpush1.msra.mxu0 0.0
  %97 = vmatprep.subr.mxu0 0.0
  %98 = vmatpush1.msra.mxu0 0.0
  %99 = vmatprep.subr.mxu0 0.0
  %100 = vmatpush1.msra.mxu0 0.0
  %101 = vmatprep.subr.mxu0 0.0
  %102 = vmatpush1.msra.mxu0 0.0
  %103 = vmatprep.subr.mxu0 0.0
  %104 = vmatpush1.msra.mxu0 0.0
  %105 = vmatprep.subr.mxu0 0.0
  %106 = vmatpush1.msra.mxu0 0.0
  %107 = vmatprep.subr.mxu0 0.0
  %108 = vmatpush1.msra.mxu0 0.0
  %109 = vmatprep.subr.mxu0 0.0
  %110 = vmatpush1.msra.mxu0 0.0
  %111 = vmatprep.subr.mxu0 0.0
  %112 = vmatpush1.msra.mxu0 0.0
  %113 = vmatprep.subr.mxu0 0.0
  %114 = vmatpush1.msra.mxu0 0.0
  %115 = vmatprep.subr.mxu0 0.0
  %116 = vmatpush1.msra.mxu0 0.0
  %117 = vmatprep.subr.mxu0 0.0
  %118 = vmatpush1.msra.mxu0 0.0
  %119 = vmatprep.subr.mxu0 0.0
  %120 = vmatpush1.msra.mxu0 0.0
  %121 = vmatprep.subr.mxu0 0.0
  %122 = vmatpush1.msra.mxu0 0.0
  %123 = vmatprep.subr.mxu0 0.0
  %124 = vmatpush1.msra.mxu0 0.0
  %125 = vmatprep.subr.mxu0 0.0
  %126 = vmatpush1.msra.mxu0 0.0
  %127 = vmatprep.mubr.f32.mxu0 0.0
  %128 = vmatmul.mubr.f32.gmra.mrb[0].mxu0 %v29
  %v129 = vpop.f32.mrb[0].mxu0
  %v130 = vadd.f32 0.0, %v129
  %v131 = vpop.f32.mrb[0].mxu0
  %132 = vmatprep.mubr.f32.mxu0 0.0
  %133 = vmatmul.mubr.f32.gmra.mrb[0].mxu0 %v30
  %v134 = vpop.f32.mrb[0].mxu0
  %v135 = vadd.f32 0.0, %v134
  %v136 = vpop.f32.mrb[0].mxu0
  %137 = vmatprep.mubr.f32.mxu0 0.0
  %138 = vmatmul.mubr.f32.gmra.mrb[0].mxu0 %v31
  %v139 = vpop.f32.mrb[0].mxu0
  %v140 = vadd.f32 0.0, %v139
  %v141 = vpop.f32.mrb[0].mxu0
  %142 = vmatprep.mubr.f32.mxu0 0.0
  %143 = vmatmul.mubr.f32.gmra.mrb[0].mxu0 %v32
  %v144 = vpop.f32.mrb[0].mxu0
  %v145 = vadd.f32 0.0, %v144
  %v146 = vpop.f32.mrb[0].mxu0
  %147 = vmatprep.mubr.f32.mxu0 0.0
  %148 = vmatmul.mubr.f32.gmra.mrb[0].mxu0 %v33
  %v149 = vpop.f32.mrb[0].mxu0
  %v150 = vadd.f32 0.0, %v149
  %v151 = vpop.f32.mrb[0].mxu0
  %152 = vmatprep.mubr.f32.mxu0 0.0
  %153 = vmatmul.mubr.f32.gmra.mrb[0].mxu0 %v34
  %v154 = vpop.f32.mrb[0].mxu0
  %v155 = vadd.f32 0.0, %v154
  %v156 = vpop.f32.mrb[0].mxu0
  %157 = vmatprep.mubr.f32.mxu0 0.0
  %158 = vmatmul.mubr.f32.gmra.mrb[0].mxu0 %v35
  %v159 = vpop.f32.mrb[0].mxu0
  %v160 = vadd.f32 0.0, %v159
  %v161 = vpop.f32.mrb[0].mxu0
  %162 = vmatprep.mubr.f32.mxu0 0.0
  %163 = vmatmul.mubr.f32.gmra.mrb[0].mxu0 %v36
  %v164 = vpop.f32.mrb[0].mxu0
  %v165 = vadd.f32 0.0, %v164
  %v166 = vpop.f32.mrb[0].mxu0
  %167 = vmatprep.mubr.f32.mxu0 0.0
  %168 = vmatmul.mubr.f32.gmra.mrb[0].mxu0 %v37
  %v169 = vpop.f32.mrb[0].mxu0
  %v170 = vadd.f32 0.0, %v169
  %v171 = vpop.f32.mrb[0].mxu0
  %172 = vmatprep.mubr.f32.mxu0 0.0
  %173 = vmatmul.mubr.f32.gmra.mrb[0].mxu0 %v38
  %v174 = vpop.f32.mrb[0].mxu0
  %v175 = vadd.f32 0.0, %v174
  %v176 = vpop.f32.mrb[0].mxu0
  %177 = vmatprep.mubr.f32.mxu0 0.0
  %178 = vmatmul.mubr.f32.gmra.mrb[0].mxu0 %v39
  %v179 = vpop.f32.mrb[0].mxu0
  %v180 = vadd.f32 0.0, %v179
  %v181 = vpop.f32.mrb[0].mxu0
  %182 = vmatprep.mubr.f32.mxu0 0.0
  %183 = vmatmul.mubr.f32.gmra.mrb[0].mxu0 %v40
  %v184 = vpop.f32.mrb[0].mxu0
  %v185 = vadd.f32 0.0, %v184
  %v186 = vpop.f32.mrb[0].mxu0
  %187 = vmatprep.mubr.f32.mxu0 0.0
  %188 = vmatmul.mubr.f32.gmra.mrb[0].mxu0 %v41
  %v189 = vpop.f32.mrb[0].mxu0
  %v190 = vadd.f32 0.0, %v189
  %v191 = vpop.f32.mrb[0].mxu0
  %192 = vmatprep.mubr.f32.mxu0 0.0
  %193 = vmatmul.mubr.f32.gmra.mrb[0].mxu0 %v42
  %v194 = vpop.f32.mrb[0].mxu0
  %v195 = vadd.f32 0.0, %v194
  %v196 = vpop.f32.mrb[0].mxu0
  %197 = vmatprep.mubr.f32.mxu0 0.0
  %198 = vmatmul.mubr.f32.gmra.mrb[0].mxu0 %v43
  %v199 = vpop.f32.mrb[0].mxu0
  %v200 = vadd.f32 0.0, %v199
  %v201 = vpop.f32.mrb[0].mxu0
  %202 = vmatprep.mubr.f32.mxu0 0.0
  %203 = vmatmul.mubr.f32.gmra.mrb[0].mxu0 %v44
  %v204 = vpop.f32.mrb[0].mxu0
  %v205 = vadd.f32 0.0, %v204
  %v206 = vpop.f32.mrb[0].mxu0
  %207 = vmatprep.mubr.f32.mxu0 0.0
  %208 = vmatmul.mubr.f32.gmra.mrb[0].mxu0 %v45
  %v209 = vpop.f32.mrb[0].mxu0
  %v210 = vadd.f32 0.0, %v209
  %v211 = vpop.f32.mrb[0].mxu0
  %212 = vmatprep.mubr.f32.mxu0 0.0
  %213 = vmatmul.mubr.f32.gmra.mrb[0].mxu0 %v46
  %v214 = vpop.f32.mrb[0].mxu0
  %v215 = vadd.f32 0.0, %v214
  %v216 = vpop.f32.mrb[0].mxu0
  %217 = vdwg.mxu0
  %v218 = vadd.f32 %v130, 1e-12
  %v219 = vadd.f32 %v135, 1e-12
  %v220 = vadd.f32 %v140, 1e-12
  %v221 = vadd.f32 %v145, 1e-12
  %v222 = vadd.f32 %v150, 1e-12
  %v223 = vadd.f32 %v155, 1e-12
  %v224 = vadd.f32 %v160, 1e-12
  %v225 = vadd.f32 %v165, 1e-12
  %v226 = vadd.f32 %v170, 1e-12
  %v227 = vadd.f32 %v175, 1e-12
  %v228 = vadd.f32 %v180, 1e-12
  %v229 = vadd.f32 %v185, 1e-12
  %v230 = vadd.f32 %v190, 1e-12
  %v231 = vadd.f32 %v195, 1e-12
  %v232 = vadd.f32 %v200, 1e-12
  %v233 = vadd.f32 %v205, 1e-12
  %v234 = vadd.f32 %v210, 1e-12
  %v235 = vadd.f32 %v215, 1e-12
  %v236 = vrsqrt.pop %v218
  %v237 = vrsqrt.pop %v219
  %v238 = vrsqrt.pop %v220
  %v239 = vrsqrt.pop %v221
  %v240 = vrsqrt.pop %v222
  %v241 = vrsqrt.pop %v223
  %v242 = vrsqrt.pop %v224
  %v243 = vrsqrt.pop %v225
  %v244 = vrsqrt.pop %v226
  %v245 = vrsqrt.pop %v227
  %v246 = vrsqrt.pop %v228
  %v247 = vrsqrt.pop %v229
  %v248 = vrsqrt.pop %v230
  %v249 = vrsqrt.pop %v231
  %v250 = vrsqrt.pop %v232
  %v251 = vrsqrt.pop %v233
  %v252 = vrsqrt.pop %v234
  %v253 = vrsqrt.pop %v235
  %v254 = vmul.f32 %v130, %v236
  %v255 = vmul.f32 %v135, %v237
  %v256 = vmul.f32 %v140, %v238
  %v257 = vmul.f32 %v145, %v239
  %v258 = vmul.f32 %v150, %v240
  %v259 = vmul.f32 %v155, %v241
  %v260 = vmul.f32 %v160, %v242
  %v261 = vmul.f32 %v165, %v243
  %v262 = vmul.f32 %v170, %v244
  %v263 = vmul.f32 %v175, %v245
  %v264 = vmul.f32 %v180, %v246
  %v265 = vmul.f32 %v185, %v247
  %v266 = vmul.f32 %v190, %v248
  %v267 = vmul.f32 %v195, %v249
  %v268 = vmul.f32 %v200, %v250
  %v269 = vmul.f32 %v205, %v251
  %v270 = vmul.f32 %v210, %v252
  %v271 = vmul.f32 %v215, %v253
  %v272 = vadd.f32 %v130, 1.0
  %v273 = vadd.f32 %v135, 1.0
  %v274 = vadd.f32 %v140, 1.0
  %v275 = vadd.f32 %v145, 1.0
  %v276 = vadd.f32 %v150, 1.0
  %v277 = vadd.f32 %v155, 1.0
  %v278 = vadd.f32 %v160, 1.0
  %v279 = vadd.f32 %v165, 1.0
  %v280 = vadd.f32 %v170, 1.0
  %v281 = vadd.f32 %v175, 1.0
  %v282 = vadd.f32 %v180, 1.0
  %v283 = vadd.f32 %v185, 1.0
  %v284 = vadd.f32 %v190, 1.0
  %v285 = vadd.f32 %v195, 1.0
  %v286 = vadd.f32 %v200, 1.0
  %v287 = vadd.f32 %v205, 1.0
  %v288 = vadd.f32 %v210, 1.0
  %v289 = vadd.f32 %v215, 1.0
  %v290 = vrcp.pop %v272
  %v291 = vrcp.pop %v273
  %v292 = vrcp.pop %v274
  %v293 = vrcp.pop %v275
  %v294 = vrcp.pop %v276
  %v295 = vrcp.pop %v277
  %v296 = vrcp.pop %v278
  %v297 = vrcp.pop %v279
  %v298 = vrcp.pop %v280
  %v299 = vrcp.pop %v281
  %v300 = vrcp.pop %v282
  %v301 = vrcp.pop %v283
  %v302 = vrcp.pop %v284
  %v303 = vrcp.pop %v285
  %v304 = vrcp.pop %v286
  %v305 = vrcp.pop %v287
  %v306 = vrcp.pop %v288
  %v307 = vrcp.pop %v289
  %v308 = vmul.f32 %v254, %v290
  %v309 = vmul.f32 %v255, %v291
  %v310 = vmul.f32 %v256, %v292
  %v311 = vmul.f32 %v257, %v293
  %v312 = vmul.f32 %v258, %v294
  %v313 = vmul.f32 %v259, %v295
  %v314 = vmul.f32 %v260, %v296
  %v315 = vmul.f32 %v261, %v297
  %v316 = vmul.f32 %v262, %v298
  %v317 = vmul.f32 %v263, %v299
  %v318 = vmul.f32 %v264, %v300
  %v319 = vmul.f32 %v265, %v301
  %v320 = vmul.f32 %v266, %v302
  %v321 = vmul.f32 %v267, %v303
  %v322 = vmul.f32 %v268, %v304
  %v323 = vmul.f32 %v269, %v305
  %v324 = vmul.f32 %v270, %v306
  %v325 = vmul.f32 %v271, %v307
  %v326 = vmul.f32 %v11, %v308
  %v327 = vmul.f32 %v12, %v309
  %v328 = vmul.f32 %v13, %v310
  %v329 = vmul.f32 %v14, %v311
  %v330 = vmul.f32 %v15, %v312
  %v331 = vmul.f32 %v16, %v313
  %v332 = vmul.f32 %v17, %v314
  %v333 = vmul.f32 %v18, %v315
  %v334 = vmul.f32 %v19, %v316
  %v335 = vmul.f32 %v20, %v317
  %v336 = vmul.f32 %v21, %v318
  %v337 = vmul.f32 %v22, %v319
  %v338 = vmul.f32 %v23, %v320
  %v339 = vmul.f32 %v24, %v321
  %v340 = vmul.f32 %v25, %v322
  %v341 = vmul.f32 %v26, %v323
  %v342 = vmul.f32 %v27, %v324
  %v343 = vmul.f32 %v28, %v325
  %344 = vst [vmem:[%s2] sm:$0xff] %v326
  %345 = vst [vmem:[%s2 + $0x8] sm:$0xff] %v327
  %346 = vst [vmem:[%s2 + $0x10] sm:$0xff] %v328
  %347 = vst [vmem:[%s2 + $0x18] sm:$0xff] %v329
  %348 = vst [vmem:[%s2 + $0x20] sm:$0xff] %v330
  %349 = vst [vmem:[%s2 + $0x28] sm:$0xff] %v331
  %350 = vst [vmem:[%s2 + $0x30] sm:$0xff] %v332
  %351 = vst [vmem:[%s2 + $0x38] sm:$0xff] %v333
  %352 = vst [vmem:[%s2 + $0x40] sm:$0xff] %v334
  %353 = vst [vmem:[%s2 + $0x48] sm:$0xff] %v335
  %354 = vst [vmem:[%s2 + $0x50] sm:$0xff] %v336
  %355 = vst [vmem:[%s2 + $0x58] sm:$0xff] %v337
  %356 = vst [vmem:[%s2 + $0x60] sm:$0xff] %v338
  %357 = vst [vmem:[%s2 + $0x68] sm:$0xff] %v339
  %358 = vst [vmem:[%s2 + $0x70] sm:$0xff] %v340
  %359 = vst [vmem:[%s2 + $0x78] sm:$0xff] %v341
  %360 = vst [vmem:[%s2 + $0x80] sm:$0xff] %v342
  %361 = vst [vmem:[%s2 + $0x88] sm:$0xff] %v343
  // Predicated region
  $region10: #{primary_caps_forward.3} parent=0 // pred_check
    _
  $region11: #{primary_caps_forward.3} parent=0 // pred_check_branch
    %363 = sbr.rel (0) target = $region13
  $region12: #{primary_caps_forward.3} parent=0 // pred_region
    _
  $region13: #{primary_caps_forward.3} parent=0 // pred_fallthru
    _
  // Predicated region
  $region14: #{primary_caps_forward.3} parent=0 // pred_check
    _
  $region15: #{primary_caps_forward.3} parent=0 // pred_check_branch
    %365 = sbr.rel (0) target = $region17
  $region16: #{primary_caps_forward.3} parent=0 // pred_region
    _
  $region17: #{primary_caps_forward.3} parent=0 // pred_fallthru
    _

</llo_original>
